<compile_context>
chip_gen: v7x
topology: tpu7x:2x2x1
jax: 0.10.0
libtpu: 0.0.40
codegen_flags: <defaults>
</compile_context>

<pallas_src>
import functools

import jax
import jax.numpy as jnp
from jax.experimental import pallas as pl
from jax.experimental.pallas import tpu as pltpu

LN_EPS = 1e-5   # nn.LayerNorm default eps
GN_EPS = 1e-5   # nn.GroupNorm default eps


def _pre_dw_kernel(xc_ref, xn_ref, ln_g_ref, ln_b_ref, w1_ref, b1_ref,
                   dw_w_ref, dw_b_ref, h_ref, sum_ref, ssq_ref, zbuf,
                   *, kernel_size, t_tile, n_t):
    """Pass 1: LayerNorm -> pointwise_conv1 -> GLU -> depthwise conv (+ GN stats)."""
    t = pl.program_id(1)
    pad = kernel_size // 2
    pad_up8 = ((pad + 7) // 8) * 8        # sublane-aligned left-halo region
    D = xc_ref.shape[2]

    # Hoist parameter loads once per step.
    ln_g = ln_g_ref[...]
    ln_b = ln_b_ref[...]
    w1 = w1_ref[...]                      # (D, 2D) bf16, pre-transposed on host
    b1 = b1_ref[...]                      # (1, 2D) f32
    dw_w = dw_w_ref[...]                  # (K, D)  f32
    dw_b = dw_b_ref[...]                  # (1, D)  f32

    # Left halo: carried in the persistent zbuf scratch from the previous
    # t step (t axis is sequential per batch); zero at the sequence start.
    @pl.when(t == 0)
    def _():
        zbuf[pl.ds(pad_up8 - pad, pad), :] = jnp.zeros((pad, D), jnp.float32)

    # One LayerNorm + one (t_tile + halo, D) x (D, 2D) MXU matmul covering the
    # centre rows plus the small right-halo lookahead rows of the next tile.
    rows = jnp.concatenate(
        [xc_ref[0].astype(jnp.float32), xn_ref[0].astype(jnp.float32)], axis=0)
    mu = jnp.mean(rows, axis=-1, keepdims=True)
    var = jnp.mean((rows - mu) ** 2, axis=-1, keepdims=True)
    xn = (rows - mu) * jax.lax.rsqrt(var + LN_EPS) * ln_g + ln_b
    y = jnp.dot(xn.astype(jnp.bfloat16), w1,
                preferred_element_type=jnp.float32) + b1
    a, g = y[:, :D], y[:, D:]
    # GLU: sigmoid via EUP exp + approx reciprocal (keeps the divide off the
    # VALU slots the depthwise K-tap accumulate is competing for).
    z = a * pl.reciprocal(1.0 + jnp.exp(-g), approx=True)

    # Centre slab lands at an 8-sublane-aligned offset -> unmasked stores.
    zbuf[pl.ds(pad_up8, t_tile), :] = z[:t_tile, :]
    if n_t > 1:
        zr = z[t_tile:t_tile + pad, :]                   # right halo ('same' pad)
        zbuf[pl.ds(pad_up8 + t_tile, pad), :] = jnp.where(t < n_t - 1, zr, 0.0)
    else:
        zbuf[pl.ds(pad_up8 + t_tile, pad), :] = jnp.zeros((pad, D), jnp.float32)

    # Depthwise conv: K static shifted windows read from the VMEM scratch.
    acc = jnp.zeros((t_tile, D), jnp.float32)
    for k in range(kernel_size):
        acc = acc + zbuf[pl.ds(pad_up8 - pad + k, t_tile), :] * dw_w[k]
    h = acc + dw_b
    h_ref[0] = h.astype(h_ref.dtype)      # bf16 intermediate (halves HBM traffic)

    # GroupNorm(1, D) statistics in f32, computed *before* the bf16 cast and
    # accumulated into a resident per-batch output block across the t tiles.
    # TODO(synk): E[x^2]-E[x]^2 can cancel for very long sequences; fine here.
    ch_sum = jnp.sum(h, axis=0, keepdims=True)           # (1, D)
    ch_ssq = jnp.sum(h * h, axis=0, keepdims=True)       # (1, D)

    @pl.when(t == 0)
    def _():
        sum_ref[0] = ch_sum
        ssq_ref[0] = ch_ssq

    @pl.when(t > 0)
    def _():
        sum_ref[0] = sum_ref[0] + ch_sum
        ssq_ref[0] = ssq_ref[0] + ch_ssq

    # Carry the last `pad` centre rows as the next step's left halo (the next
    # step overwrites the centre region, so stash them now).
    zbuf[pl.ds(pad_up8 - pad, pad), :] = zbuf[pl.ds(pad_up8 + t_tile - pad, pad), :]


def _finalize_kernel(h_ref, scale_ref, shift_ref, w2_ref, b2_ref, o_ref):
    """Pass 2: fused GroupNorm affine -> ReLU -> pointwise_conv2."""
    hn = h_ref[0].astype(jnp.float32) * scale_ref[0] + shift_ref[0]
    hn = jnp.maximum(hn, 0.0)                            # ReLU
    out = jnp.dot(hn.astype(jnp.bfloat16), w2_ref[...],
                  preferred_element_type=jnp.float32) + b2_ref[...]
    # TODO(synk): training-mode dropout (p=0.1) not implemented (eval semantics).
    o_ref[0] = out.astype(o_ref.dtype)


def _full_spec(a):
    """Whole-array block, constant index map (resident across the (b, t) grid)."""
    # NOTE: pipeline_mode=pl.Buffered(1) would drop the second pipeline buffer
    # for these constant-index weight blocks (VMEM saving on v7x); omitted for
    # jax-version portability.
    return pl.BlockSpec(a.shape, lambda b, t, _nd=a.ndim: (0,) * _nd)


def _pick_t_tile(T, D, pad):
    budget = 2 * 1024 * 1024                      # f32 (t_tile, 2D) matmul temp
    for cand in (512, 256, 128, 64, 32, 16, 8):   # multiples of 8 sublanes
        if T % cand == 0 and cand >= pad and cand * (2 * D) * 4 <= budget:
            return cand
    return T


def _vmem_limit_bytes(est):
    """Generation-aware scoped-VMEM limit (v5e/v6e: 128 MiB phys, v7x: 64 MiB)."""
    try:
        phys = pltpu.get_tpu_info().vmem_capacity_bytes
    except Exception:
        phys = 64 * 1024 * 1024                   # conservative fallback (v7x)
    cap = min(int(phys * 3 // 4), 100 * 1024 * 1024)
    floor = 32 * 1024 * 1024
    return int(min(max(2 * est, floor), cap))


def conformer_conv_module(x, params, *, kernel_size, t_tile=None):
    """x: (B, T, D) float32 -> (B, T, D) float32 (matches the PyTorch module)."""
    B, T, D = x.shape
    (ln_g, ln_b, w1t, b1, dw_w, dw_b, gn_g, gn_b, w2t, b2) = params
    assert kernel_size % 2 == 1, "'same' depthwise padding assumes odd kernel_size"
    pad = kernel_size // 2
    pad_up8 = ((pad + 7) // 8) * 8

    if t_tile is None:
        t_tile = _pick_t_tile(T, D, pad)
    assert T % t_tile == 0, "t_tile must divide T"
    assert t_tile == T or t_tile % 8 == 0, "t_tile must be a multiple of 8 sublanes"
    assert t_tile >= pad, "t_tile must cover the depthwise halo"
    n_t = T // t_tile

    halo_rows = min(pad_up8, t_tile)
    if n_t > 1:
        assert halo_rows >= pad and t_tile % halo_rows == 0, \
            "t_tile must be a multiple of the 8-row-aligned halo size"
    halo_blocks_per_tile = max(t_tile // halo_rows, 1)
    n_halo_blocks = max(T // halo_rows, 1)

    # bf16 MXU operands (f32 accumulation); weights arrive pre-transposed as
    # (D_in, D_out) so no in-kernel transpose is ever needed.
    w1_bf = w1t.astype(jnp.bfloat16)
    w2_bf = w2t.astype(jnp.bfloat16)

    act_in_spec = pl.BlockSpec((1, t_tile, D), lambda b, t: (b, t, 0))
    # Right-halo lookahead: only the first 8-row sub-block of tile t+1.
    halo_spec = pl.BlockSpec(
        (1, halo_rows, D),
        lambda b, t: (b, jnp.minimum((t + 1) * halo_blocks_per_tile,
                                     n_halo_blocks - 1), 0))
    h_spec = pl.BlockSpec((1, t_tile, D), lambda b, t: (b, t, 0))
    stat_spec = pl.BlockSpec((1, 1, D), lambda b, t: (b, 0, 0))

    w1_bytes = w1_bf.size * 2 + (b1.size + ln_g.size + ln_b.size
                                 + dw_w.size + dw_b.size) * 4
    w2_bytes = w2_bf.size * 2 + b2.size * 4

    vmem1_est = (2 * (t_tile + halo_rows) * D * 4        # x blocks (double-buffered)
                 + 2 * (t_tile * D * 2 + 2 * D * 4)      # h (bf16) + stats outputs
                 + 2 * w1_bytes                          # weights (double-buffered)
                 + (t_tile + 2 * pad_up8) * D * 4        # zbuf scratch
                 + (t_tile + halo_rows) * 3 * D * 4)     # rows / y / z temporaries
    vmem2_est = (2 * t_tile * D * 2 + 2 * t_tile * D * 4 # h in + out
                 + 2 * w2_bytes + 4 * 2 * D * 4          # weights + scale/shift
                 + 2 * t_tile * D * 4)                   # temporaries

    cost1 = pl.CostEstimate(
        flops=int(B * (T + n_t * halo_rows) * (4 * D * D + 12 * D)
                  + B * T * 2 * kernel_size * D),
        transcendentals=int(B * (T + n_t * halo_rows) * D),        # exp (sigmoid)
        bytes_accessed=int(4 * B * (T + n_t * halo_rows) * D       # x reads
                           + 2 * B * T * D + 8 * B * D             # h + stats writes
                           + w1_bytes),
    )
    cost2 = pl.CostEstimate(
        flops=int(B * T * (2 * D * D + 4 * D)),
        transcendentals=0,
        bytes_accessed=int(2 * B * T * D + 4 * B * T * D + 8 * B * D + w2_bytes),
    )

    # ---- Pass 1: LN -> pw1 -> GLU -> depthwise conv (+ GroupNorm statistics).
    h, h_sum, h_ssq = pl.pallas_call(
        functools.partial(_pre_dw_kernel, kernel_size=kernel_size,
                          t_tile=t_tile, n_t=n_t),
        out_shape=(
            jax.ShapeDtypeStruct((B, T, D), jnp.bfloat16),   # bf16 intermediate
            jax.ShapeDtypeStruct((B, 1, D), jnp.float32),
            jax.ShapeDtypeStruct((B, 1, D), jnp.float32),
        ),
        grid_spec=pltpu.PrefetchScalarGridSpec(
            num_scalar_prefetch=0,
            grid=(B, n_t),
            in_specs=[
                act_in_spec, halo_spec,
                _full_spec(ln_g), _full_spec(ln_b),
                _full_spec(w1_bf), _full_spec(b1),
                _full_spec(dw_w), _full_spec(dw_b),
            ],
            out_specs=(h_spec, stat_spec, stat_spec),
            scratch_shapes=[pltpu.VMEM((t_tile + 2 * pad_up8, D), jnp.float32)],
        ),
        compiler_params=pltpu.CompilerParams(
            # t carries the left-halo / GN-stat state -> must stay "arbitrary";
            # the batch axis is megacore-parallel.
            dimension_semantics=("parallel", "arbitrary"),
            vmem_limit_bytes=_vmem_limit_bytes(vmem1_est)),
        cost_estimate=cost1,
    )(x, x, ln_g, ln_b, w1_bf, b1, dw_w, dw_b)

    # ---- GroupNorm(1, D): fold per-batch statistics into scale/shift outside
    # the kernel (a tiny (B, D)-sized JAX op between the two pallas_calls).
    cnt = float(T * D)
    s = jnp.sum(h_sum, axis=2, keepdims=True)        # (B, 1, 1)
    ss = jnp.sum(h_ssq, axis=2, keepdims=True)
    mean = s / cnt
    var = ss / cnt - mean * mean
    inv_std = jax.lax.rsqrt(var + GN_EPS)
    scale = gn_g[None, :, :] * inv_std               # (B, 1, D)
    shift = gn_b[None, :, :] - mean * scale          # (B, 1, D)

    # ---- Pass 2: fused GroupNorm affine -> ReLU -> pw2 (fully parallel grid).
    out = pl.pallas_call(
        _finalize_kernel,
        out_shape=jax.ShapeDtypeStruct((B, T, D), x.dtype),
        grid_spec=pltpu.PrefetchScalarGridSpec(
            num_scalar_prefetch=0,
            grid=(B, n_t),
            in_specs=[
                h_spec, stat_spec, stat_spec,
                _full_spec(w2_bf), _full_spec(b2),
            ],
            out_specs=pl.BlockSpec((1, t_tile, D), lambda b, t: (b, t, 0)),
        ),
        compiler_params=pltpu.CompilerParams(
            dimension_semantics=("parallel", "parallel"),
            vmem_limit_bytes=_vmem_limit_bytes(vmem2_est)),
        cost_estimate=cost2,
    )(h, scale, shift, w2_bf, b2)

    return out


def make_params(key, dim_model, kernel_size):
    """Deterministic synthetic parameters, stored in kernel-friendly layouts.

    w1t[d, c] == pointwise_conv1.weight[c, d, 0]   -> (D, 2D)   (pre-transposed)
    dw_w[k, d] == depthwise_conv.weight[d, 0, k]   -> (K, D)
    w2t[d, c] == pointwise_conv2.weight[c, d, 0]   -> (D, D)    (pre-transposed)
    """
    D, K = dim_model, kernel_size
    ks = jax.random.split(key, 10)
    scale = 0.1
    ln_g = 1.0 + scale * jax.random.normal(ks[0], (1, D), jnp.float32)
    ln_b = scale * jax.random.normal(ks[1], (1, D), jnp.float32)
    w1t = scale * jax.random.normal(ks[2], (D, 2 * D), jnp.float32)
    b1 = scale * jax.random.normal(ks[3], (1, 2 * D), jnp.float32)
    dw_w = scale * jax.random.normal(ks[4], (K, D), jnp.float32)
    dw_b = scale * jax.random.normal(ks[5], (1, D), jnp.float32)
    gn_g = 1.0 + scale * jax.random.normal(ks[6], (1, D), jnp.float32)
    gn_b = scale * jax.random.normal(ks[7], (1, D), jnp.float32)
    w2t = scale * jax.random.normal(ks[8], (D, D), jnp.float32)
    b2 = scale * jax.random.normal(ks[9], (1, D), jnp.float32)
    return (ln_g, ln_b, w1t, b1, dw_w, dw_b, gn_g, gn_b, w2t, b2)


def reference(x, params, kernel_size):
    """Pure-JAX reference mirroring kernel numerics (bf16 matmuls, bf16 h)."""
    (ln_g, ln_b, w1t, b1, dw_w, dw_b, gn_g, gn_b, w2t, b2) = params
    B, T, D = x.shape
    pad = kernel_size // 2

    mu = x.mean(-1, keepdims=True)
    var = ((x - mu) ** 2).mean(-1, keepdims=True)
    x_ln = (x - mu) * jax.lax.rsqrt(var + LN_EPS) * ln_g + ln_b

    y = jnp.einsum("btd,dc->btc", x_ln.astype(jnp.bfloat16),
                   w1t.astype(jnp.bfloat16),
                   preferred_element_type=jnp.float32) + b1
    a, g = y[..., :D], y[..., D:]
    z = a * jax.nn.sigmoid(g)

    zp = jnp.pad(z, ((0, 0), (pad, pad), (0, 0)))
    h = sum(zp[:, k:k + T, :] * dw_w[k] for k in range(kernel_size)) + dw_b

    cnt = float(T * D)
    s = h.sum(axis=(1, 2), keepdims=True)
    ss = (h * h).sum(axis=(1, 2), keepdims=True)
    mean = s / cnt
    gvar = ss / cnt - mean * mean
    h_q = h.astype(jnp.bfloat16).astype(jnp.float32)   # matches bf16 HBM round-trip
    hn = (h_q - mean) * jax.lax.rsqrt(gvar + GN_EPS) * gn_g + gn_b
    hn = jnp.maximum(hn, 0.0)

    return jnp.einsum("btd,dc->btc", hn.astype(jnp.bfloat16),
                      w2t.astype(jnp.bfloat16),
                      preferred_element_type=jnp.float32) + b2


if __name__ == "__main__":
    # Small but lane-aligned demo shapes: D = 128 lanes, two T tiles (so the
    # halo-carry path is exercised), B = 2.
    B, T, D, K = 2, 32, 128, 15
    key = jax.random.PRNGKey(0)
    kx, kp = jax.random.split(key)

    x = jax.random.normal(kx, (B, T, D), jnp.float32)
    params = make_params(kp, D, K)

    out = conformer_conv_module(x, params, kernel_size=K, t_tile=16)
    out = jax.block_until_ready(out)

    ref = reference(x, params, K)
    assert out.shape == (B, T, D)
    max_err = float(jnp.max(jnp.abs(out - ref)))
    assert max_err < 2e-2, max_err

    print("KERNEL_OK")
</pallas_src>

<mosaic_0001>
module attributes {stable_mosaic.version = 11 : i64} {
  func.func @_pre_dw_kernel(%arg0: i32, %arg1: i32, %arg2: memref<1x16x128xf32, #tpu.memory_space<vmem>>, %arg3: memref<1x8x128xf32, #tpu.memory_space<vmem>>, %arg4: memref<1x128xf32, #tpu.memory_space<vmem>>, %arg5: memref<1x128xf32, #tpu.memory_space<vmem>>, %arg6: memref<128x256xbf16, #tpu.memory_space<vmem>>, %arg7: memref<1x256xf32, #tpu.memory_space<vmem>>, %arg8: memref<15x128xf32, #tpu.memory_space<vmem>>, %arg9: memref<1x128xf32, #tpu.memory_space<vmem>>, %arg10: memref<1x16x128xbf16, #tpu.memory_space<vmem>>, %arg11: memref<1x1x128xf32, #tpu.memory_space<vmem>>, %arg12: memref<1x1x128xf32, #tpu.memory_space<vmem>>, %arg13: memref<32x128xf32, #tpu.memory_space<vmem>>) attributes {dimension_semantics = [#tpu.dimension_semantics<parallel>, #tpu.dimension_semantics<arbitrary>], iteration_bounds = array<i64: 2, 2>, scalar_prefetch = 0 : i64, scratch_operands = 1 : i64, tpu.core_type = #tpu.core_type<tc>, window_params = [{transform_indices = @transform_0, window_bounds = array<i64: 1, 16, 128>}, {transform_indices = @transform_1, window_bounds = array<i64: 1, 8, 128>}, {pipeline_mode = #tpu.pipeline_mode<synchronous>, transform_indices = @transform_2, window_bounds = array<i64: 1, 128>}, {pipeline_mode = #tpu.pipeline_mode<synchronous>, transform_indices = @transform_3, window_bounds = array<i64: 1, 128>}, {pipeline_mode = #tpu.pipeline_mode<synchronous>, transform_indices = @transform_4, window_bounds = array<i64: 128, 256>}, {pipeline_mode = #tpu.pipeline_mode<synchronous>, transform_indices = @transform_5, window_bounds = array<i64: 1, 256>}, {pipeline_mode = #tpu.pipeline_mode<synchronous>, transform_indices = @transform_6, window_bounds = array<i64: 15, 128>}, {pipeline_mode = #tpu.pipeline_mode<synchronous>, transform_indices = @transform_7, window_bounds = array<i64: 1, 128>}, {transform_indices = @transform_8, window_bounds = array<i64: 1, 16, 128>}, {transform_indices = @transform_9, window_bounds = array<i64: 1, 1, 128>}, {transform_indices = @transform_10, window_bounds = array<i64: 1, 1, 128>}]} {
    %c0 = arith.constant 0 : index
    %c0_0 = arith.constant 0 : index
    %0 = vector.load %arg4[%c0, %c0_0] : memref<1x128xf32, #tpu.memory_space<vmem>>, vector<1x128xf32>
    %c0_1 = arith.constant 0 : index
    %c0_2 = arith.constant 0 : index
    %1 = vector.load %arg5[%c0_1, %c0_2] : memref<1x128xf32, #tpu.memory_space<vmem>>, vector<1x128xf32>
    %c0_3 = arith.constant 0 : index
    %c0_4 = arith.constant 0 : index
    %2 = vector.load %arg6[%c0_3, %c0_4] : memref<128x256xbf16, #tpu.memory_space<vmem>>, vector<128x256xbf16>
    %c0_5 = arith.constant 0 : index
    %c0_6 = arith.constant 0 : index
    %3 = vector.load %arg7[%c0_5, %c0_6] : memref<1x256xf32, #tpu.memory_space<vmem>>, vector<1x256xf32>
    %c0_7 = arith.constant 0 : index
    %c0_8 = arith.constant 0 : index
    %4 = vector.load %arg8[%c0_7, %c0_8] : memref<15x128xf32, #tpu.memory_space<vmem>>, vector<15x128xf32>
    %c0_9 = arith.constant 0 : index
    %c0_10 = arith.constant 0 : index
    %5 = vector.load %arg9[%c0_9, %c0_10] : memref<1x128xf32, #tpu.memory_space<vmem>>, vector<1x128xf32>
    %c0_i32 = arith.constant 0 : i32
    %6 = arith.cmpi eq, %arg1, %c0_i32 : i32
    %7 = arith.extui %6 : i1 to i32
    %c0_i32_11 = arith.constant 0 : i32
    %8 = arith.cmpi ne, %7, %c0_i32_11 : i32
    scf.if %8 {
      %cst_57 = arith.constant 0.000000e+00 : f32
      %181 = vector.broadcast %cst_57 : f32 to vector<7x128xf32>
      %c1_58 = arith.constant 1 : index
      %c0_59 = arith.constant 0 : index
      %182 = vector.load %arg13[%c1_58, %c0_59] : memref<32x128xf32, #tpu.memory_space<vmem>>, vector<7x128xf32>
      tpu.vector_store %arg13[%c1_58, %c0_59], %181 {strides = array<i32>} : memref<32x128xf32, #tpu.memory_space<vmem>>, vector<7x128xf32>,
    } else {
    }
    %c0_12 = arith.constant 0 : index
    %c0_13 = arith.constant 0 : index
    %c0_14 = arith.constant 0 : index
    %9 = vector.load %arg2[%c0_12, %c0_13, %c0_14] : memref<1x16x128xf32, #tpu.memory_space<vmem>>, vector<1x16x128xf32>
    %10 = vector.shape_cast %9 : vector<1x16x128xf32> to vector<16x128xf32>
    %c0_15 = arith.constant 0 : index
    %c0_16 = arith.constant 0 : index
    %c0_17 = arith.constant 0 : index
    %11 = vector.load %arg3[%c0_15, %c0_16, %c0_17] : memref<1x8x128xf32, #tpu.memory_space<vmem>>, vector<1x8x128xf32>
    %12 = vector.shape_cast %11 : vector<1x8x128xf32> to vector<8x128xf32>
    %13 = tpu.concatenate %10, %12 in 0 : vector<16x128xf32>, vector<8x128xf32> -> vector<24x128xf32>
    %cst = arith.constant dense<0.000000e+00> : vector<24xf32>
    %14 = vector.multi_reduction <add>, %13, %cst [1] : vector<24x128xf32> to vector<24xf32>
    %15 = vector.shape_cast %14 : vector<24xf32> to vector<24x1xf32>
    %cst_18 = arith.constant 1.280000e+02 : f32
    %16 = vector.broadcast %cst_18 : f32 to vector<24x1xf32>
    %17 = arith.divf %15, %16 : vector<24x1xf32>
    %18 = vector.broadcast %17 : vector<24x1xf32> to vector<24x128xf32>
    %19 = arith.subf %13, %18 : vector<24x128xf32>
    %20 = arith.mulf %19, %19 : vector<24x128xf32>
    %cst_19 = arith.constant dense<0.000000e+00> : vector<24xf32>
    %21 = vector.multi_reduction <add>, %20, %cst_19 [1] : vector<24x128xf32> to vector<24xf32>
    %22 = vector.shape_cast %21 : vector<24xf32> to vector<24x1xf32>
    %cst_20 = arith.constant 1.280000e+02 : f32
    %23 = vector.broadcast %cst_20 : f32 to vector<24x1xf32>
    %24 = arith.divf %22, %23 : vector<24x1xf32>
    %25 = vector.broadcast %17 : vector<24x1xf32> to vector<24x128xf32>
    %26 = arith.subf %13, %25 : vector<24x128xf32>
    %cst_21 = arith.constant 9.99999974E-6 : f32
    %27 = vector.broadcast %cst_21 : f32 to vector<24x1xf32>
    %28 = arith.addf %24, %27 : vector<24x1xf32>
    %29 = math.rsqrt %28 : vector<24x1xf32>
    %30 = vector.broadcast %29 : vector<24x1xf32> to vector<24x128xf32>
    %31 = arith.mulf %26, %30 : vector<24x128xf32>
    %32 = vector.broadcast %0 : vector<1x128xf32> to vector<24x128xf32>
    %33 = arith.mulf %31, %32 : vector<24x128xf32>
    %34 = vector.broadcast %1 : vector<1x128xf32> to vector<24x128xf32>
    %35 = arith.addf %33, %34 : vector<24x128xf32>
    %36 = arith.truncf %35 : vector<24x128xf32> to vector<24x128xbf16>
    %cst_22 = arith.constant dense<0.000000e+00> : vector<24x256xf32>
    %37 = tpu.matmul %36, %2, %cst_22 {dimension_numbers = #tpu.dot_dimension_numbers<[1], [0], [0], [1], [0, 0, 1, 1], [], []>} : vector<24x128xbf16>, vector<128x256xbf16>, vector<24x256xf32> -> vector<24x256xf32>
    %38 = vector.broadcast %3 : vector<1x256xf32> to vector<24x256xf32>
    %39 = arith.addf %37, %38 : vector<24x256xf32>
    %40 = vector.extract_strided_slice %39 {offsets = [0, 0], sizes = [24, 128], strides = [1, 1]} : vector<24x256xf32> to vector<24x128xf32>
    %41 = vector.extract_strided_slice %39 {offsets = [0, 128], sizes = [24, 128], strides = [1, 1]} : vector<24x256xf32> to vector<24x128xf32>
    %cst_23 = arith.constant 0.000000e+00 : f32
    %42 = vector.broadcast %cst_23 : f32 to vector<24x128xf32>
    %43 = arith.subf %42, %41 : vector<24x128xf32>
    %44 = math.exp %43 : vector<24x128xf32>
    %cst_24 = arith.constant 1.000000e+00 : f32
    %45 = vector.broadcast %cst_24 : f32 to vector<24x128xf32>
    %46 = arith.addf %45, %44 : vector<24x128xf32>
    %47 = tpu.reciprocal %46 {approx = true} : vector<24x128xf32> -> vector<24x128xf32>
    %48 = arith.mulf %40, %47 : vector<24x128xf32>
    %49 = vector.extract_strided_slice %48 {offsets = [0, 0], sizes = [16, 128], strides = [1, 1]} : vector<24x128xf32> to vector<16x128xf32>
    %c8 = arith.constant 8 : index
    %c0_25 = arith.constant 0 : index
    %50 = vector.load %arg13[%c8, %c0_25] : memref<32x128xf32, #tpu.memory_space<vmem>>, vector<16x128xf32>
    tpu.vector_store %arg13[%c8, %c0_25], %49 {strides = array<i32>} : memref<32x128xf32, #tpu.memory_space<vmem>>, vector<16x128xf32>,
    %51 = vector.extract_strided_slice %48 {offsets = [16, 0], sizes = [7, 128], strides = [1, 1]} : vector<24x128xf32> to vector<7x128xf32>
    %c1_i32 = arith.constant 1 : i32
    %52 = arith.cmpi slt, %arg1, %c1_i32 : i32
    %cst_26 = arith.constant 0.000000e+00 : f32
    %53 = vector.broadcast %cst_26 : f32 to vector<7x128xf32>
    %54 = arith.select %52, %51, %53 : vector<7x128xf32>
    %c24 = arith.constant 24 : index
    %c0_27 = arith.constant 0 : index
    %55 = vector.load %arg13[%c24, %c0_27] : memref<32x128xf32, #tpu.memory_space<vmem>>, vector<7x128xf32>
    tpu.vector_store %arg13[%c24, %c0_27], %54 {strides = array<i32>} : memref<32x128xf32, #tpu.memory_space<vmem>>, vector<7x128xf32>,
    %cst_28 = arith.constant 0.000000e+00 : f32
    %56 = vector.broadcast %cst_28 : f32 to vector<16x128xf32>
    %c1 = arith.constant 1 : index
    %c0_29 = arith.constant 0 : index
    %57 = vector.load %arg13[%c1, %c0_29] : memref<32x128xf32, #tpu.memory_space<vmem>>, vector<16x128xf32>
    %58 = vector.extract_strided_slice %4 {offsets = [0, 0], sizes = [1, 128], strides = [1, 1]} : vector<15x128xf32> to vector<1x128xf32>
    %59 = vector.shape_cast %58 : vector<1x128xf32> to vector<128xf32>
    %60 = vector.shape_cast %59 : vector<128xf32> to vector<1x128xf32>
    %61 = vector.broadcast %60 : vector<1x128xf32> to vector<16x128xf32>
    %62 = arith.mulf %57, %61 : vector<16x128xf32>
    %63 = arith.addf %56, %62 : vector<16x128xf32>
    %c2 = arith.constant 2 : index
    %c0_30 = arith.constant 0 : index
    %64 = vector.load %arg13[%c2, %c0_30] : memref<32x128xf32, #tpu.memory_space<vmem>>, vector<16x128xf32>
    %65 = vector.extract_strided_slice %4 {offsets = [1, 0], sizes = [1, 128], strides = [1, 1]} : vector<15x128xf32> to vector<1x128xf32>
    %66 = vector.shape_cast %65 : vector<1x128xf32> to vector<128xf32>
    %67 = vector.shape_cast %66 : vector<128xf32> to vector<1x128xf32>
    %68 = vector.broadcast %67 : vector<1x128xf32> to vector<16x128xf32>
    %69 = arith.mulf %64, %68 : vector<16x128xf32>
    %70 = arith.addf %63, %69 : vector<16x128xf32>
    %c3 = arith.constant 3 : index
    %c0_31 = arith.constant 0 : index
    %71 = vector.load %arg13[%c3, %c0_31] : memref<32x128xf32, #tpu.memory_space<vmem>>, vector<16x128xf32>
    %72 = vector.extract_strided_slice %4 {offsets = [2, 0], sizes = [1, 128], strides = [1, 1]} : vector<15x128xf32> to vector<1x128xf32>
    %73 = vector.shape_cast %72 : vector<1x128xf32> to vector<128xf32>
    %74 = vector.shape_cast %73 : vector<128xf32> to vector<1x128xf32>
    %75 = vector.broadcast %74 : vector<1x128xf32> to vector<16x128xf32>
    %76 = arith.mulf %71, %75 : vector<16x128xf32>
    %77 = arith.addf %70, %76 : vector<16x128xf32>
    %c4 = arith.constant 4 : index
    %c0_32 = arith.constant 0 : index
    %78 = vector.load %arg13[%c4, %c0_32] : memref<32x128xf32, #tpu.memory_space<vmem>>, vector<16x128xf32>
    %79 = vector.extract_strided_slice %4 {offsets = [3, 0], sizes = [1, 128], strides = [1, 1]} : vector<15x128xf32> to vector<1x128xf32>
    %80 = vector.shape_cast %79 : vector<1x128xf32> to vector<128xf32>
    %81 = vector.shape_cast %80 : vector<128xf32> to vector<1x128xf32>
    %82 = vector.broadcast %81 : vector<1x128xf32> to vector<16x128xf32>
    %83 = arith.mulf %78, %82 : vector<16x128xf32>
    %84 = arith.addf %77, %83 : vector<16x128xf32>
    %c5 = arith.constant 5 : index
    %c0_33 = arith.constant 0 : index
    %85 = vector.load %arg13[%c5, %c0_33] : memref<32x128xf32, #tpu.memory_space<vmem>>, vector<16x128xf32>
    %86 = vector.extract_strided_slice %4 {offsets = [4, 0], sizes = [1, 128], strides = [1, 1]} : vector<15x128xf32> to vector<1x128xf32>
    %87 = vector.shape_cast %86 : vector<1x128xf32> to vector<128xf32>
    %88 = vector.shape_cast %87 : vector<128xf32> to vector<1x128xf32>
    %89 = vector.broadcast %88 : vector<1x128xf32> to vector<16x128xf32>
    %90 = arith.mulf %85, %89 : vector<16x128xf32>
    %91 = arith.addf %84, %90 : vector<16x128xf32>
    %c6 = arith.constant 6 : index
    %c0_34 = arith.constant 0 : index
    %92 = vector.load %arg13[%c6, %c0_34] : memref<32x128xf32, #tpu.memory_space<vmem>>, vector<16x128xf32>
    %93 = vector.extract_strided_slice %4 {offsets = [5, 0], sizes = [1, 128], strides = [1, 1]} : vector<15x128xf32> to vector<1x128xf32>
    %94 = vector.shape_cast %93 : vector<1x128xf32> to vector<128xf32>
    %95 = vector.shape_cast %94 : vector<128xf32> to vector<1x128xf32>
    %96 = vector.broadcast %95 : vector<1x128xf32> to vector<16x128xf32>
    %97 = arith.mulf %92, %96 : vector<16x128xf32>
    %98 = arith.addf %91, %97 : vector<16x128xf32>
    %c7 = arith.constant 7 : index
    %c0_35 = arith.constant 0 : index
    %99 = vector.load %arg13[%c7, %c0_35] : memref<32x128xf32, #tpu.memory_space<vmem>>, vector<16x128xf32>
    %100 = vector.extract_strided_slice %4 {offsets = [6, 0], sizes = [1, 128], strides = [1, 1]} : vector<15x128xf32> to vector<1x128xf32>
    %101 = vector.shape_cast %100 : vector<1x128xf32> to vector<128xf32>
    %102 = vector.shape_cast %101 : vector<128xf32> to vector<1x128xf32>
    %103 = vector.broadcast %102 : vector<1x128xf32> to vector<16x128xf32>
    %104 = arith.mulf %99, %103 : vector<16x128xf32>
    %105 = arith.addf %98, %104 : vector<16x128xf32>
    %c8_36 = arith.constant 8 : index
    %c0_37 = arith.constant 0 : index
    %106 = vector.load %arg13[%c8_36, %c0_37] : memref<32x128xf32, #tpu.memory_space<vmem>>, vector<16x128xf32>
    %107 = vector.extract_strided_slice %4 {offsets = [7, 0], sizes = [1, 128], strides = [1, 1]} : vector<15x128xf32> to vector<1x128xf32>
    %108 = vector.shape_cast %107 : vector<1x128xf32> to vector<128xf32>
    %109 = vector.shape_cast %108 : vector<128xf32> to vector<1x128xf32>
    %110 = vector.broadcast %109 : vector<1x128xf32> to vector<16x128xf32>
    %111 = arith.mulf %106, %110 : vector<16x128xf32>
    %112 = arith.addf %105, %111 : vector<16x128xf32>
    %c9 = arith.constant 9 : index
    %c0_38 = arith.constant 0 : index
    %113 = vector.load %arg13[%c9, %c0_38] : memref<32x128xf32, #tpu.memory_space<vmem>>, vector<16x128xf32>
    %114 = vector.extract_strided_slice %4 {offsets = [8, 0], sizes = [1, 128], strides = [1, 1]} : vector<15x128xf32> to vector<1x128xf32>
    %115 = vector.shape_cast %114 : vector<1x128xf32> to vector<128xf32>
    %116 = vector.shape_cast %115 : vector<128xf32> to vector<1x128xf32>
    %117 = vector.broadcast %116 : vector<1x128xf32> to vector<16x128xf32>
    %118 = arith.mulf %113, %117 : vector<16x128xf32>
    %119 = arith.addf %112, %118 : vector<16x128xf32>
    %c10 = arith.constant 10 : index
    %c0_39 = arith.constant 0 : index
    %120 = vector.load %arg13[%c10, %c0_39] : memref<32x128xf32, #tpu.memory_space<vmem>>, vector<16x128xf32>
    %121 = vector.extract_strided_slice %4 {offsets = [9, 0], sizes = [1, 128], strides = [1, 1]} : vector<15x128xf32> to vector<1x128xf32>
    %122 = vector.shape_cast %121 : vector<1x128xf32> to vector<128xf32>
    %123 = vector.shape_cast %122 : vector<128xf32> to vector<1x128xf32>
    %124 = vector.broadcast %123 : vector<1x128xf32> to vector<16x128xf32>
    %125 = arith.mulf %120, %124 : vector<16x128xf32>
    %126 = arith.addf %119, %125 : vector<16x128xf32>
    %c11 = arith.constant 11 : index
    %c0_40 = arith.constant 0 : index
    %127 = vector.load %arg13[%c11, %c0_40] : memref<32x128xf32, #tpu.memory_space<vmem>>, vector<16x128xf32>
    %128 = vector.extract_strided_slice %4 {offsets = [10, 0], sizes = [1, 128], strides = [1, 1]} : vector<15x128xf32> to vector<1x128xf32>
    %129 = vector.shape_cast %128 : vector<1x128xf32> to vector<128xf32>
    %130 = vector.shape_cast %129 : vector<128xf32> to vector<1x128xf32>
    %131 = vector.broadcast %130 : vector<1x128xf32> to vector<16x128xf32>
    %132 = arith.mulf %127, %131 : vector<16x128xf32>
    %133 = arith.addf %126, %132 : vector<16x128xf32>
    %c12 = arith.constant 12 : index
    %c0_41 = arith.constant 0 : index
    %134 = vector.load %arg13[%c12, %c0_41] : memref<32x128xf32, #tpu.memory_space<vmem>>, vector<16x128xf32>
    %135 = vector.extract_strided_slice %4 {offsets = [11, 0], sizes = [1, 128], strides = [1, 1]} : vector<15x128xf32> to vector<1x128xf32>
    %136 = vector.shape_cast %135 : vector<1x128xf32> to vector<128xf32>
    %137 = vector.shape_cast %136 : vector<128xf32> to vector<1x128xf32>
    %138 = vector.broadcast %137 : vector<1x128xf32> to vector<16x128xf32>
    %139 = arith.mulf %134, %138 : vector<16x128xf32>
    %140 = arith.addf %133, %139 : vector<16x128xf32>
    %c13 = arith.constant 13 : index
    %c0_42 = arith.constant 0 : index
    %141 = vector.load %arg13[%c13, %c0_42] : memref<32x128xf32, #tpu.memory_space<vmem>>, vector<16x128xf32>
    %142 = vector.extract_strided_slice %4 {offsets = [12, 0], sizes = [1, 128], strides = [1, 1]} : vector<15x128xf32> to vector<1x128xf32>
    %143 = vector.shape_cast %142 : vector<1x128xf32> to vector<128xf32>
    %144 = vector.shape_cast %143 : vector<128xf32> to vector<1x128xf32>
    %145 = vector.broadcast %144 : vector<1x128xf32> to vector<16x128xf32>
    %146 = arith.mulf %141, %145 : vector<16x128xf32>
    %147 = arith.addf %140, %146 : vector<16x128xf32>
    %c14 = arith.constant 14 : index
    %c0_43 = arith.constant 0 : index
    %148 = vector.load %arg13[%c14, %c0_43] : memref<32x128xf32, #tpu.memory_space<vmem>>, vector<16x128xf32>
    %149 = vector.extract_strided_slice %4 {offsets = [13, 0], sizes = [1, 128], strides = [1, 1]} : vector<15x128xf32> to vector<1x128xf32>
    %150 = vector.shape_cast %149 : vector<1x128xf32> to vector<128xf32>
    %151 = vector.shape_cast %150 : vector<128xf32> to vector<1x128xf32>
    %152 = vector.broadcast %151 : vector<1x128xf32> to vector<16x128xf32>
    %153 = arith.mulf %148, %152 : vector<16x128xf32>
    %154 = arith.addf %147, %153 : vector<16x128xf32>
    %c15 = arith.constant 15 : index
    %c0_44 = arith.constant 0 : index
    %155 = vector.load %arg13[%c15, %c0_44] : memref<32x128xf32, #tpu.memory_space<vmem>>, vector<16x128xf32>
    %156 = vector.extract_strided_slice %4 {offsets = [14, 0], sizes = [1, 128], strides = [1, 1]} : vector<15x128xf32> to vector<1x128xf32>
    %157 = vector.shape_cast %156 : vector<1x128xf32> to vector<128xf32>
    %158 = vector.shape_cast %157 : vector<128xf32> to vector<1x128xf32>
    %159 = vector.broadcast %158 : vector<1x128xf32> to vector<16x128xf32>
    %160 = arith.mulf %155, %159 : vector<16x128xf32>
    %161 = arith.addf %154, %160 : vector<16x128xf32>
    %162 = vector.broadcast %5 : vector<1x128xf32> to vector<16x128xf32>
    %163 = arith.addf %161, %162 : vector<16x128xf32>
    %164 = arith.truncf %163 : vector<16x128xf32> to vector<16x128xbf16>
    %c0_45 = arith.constant 0 : index
    %c0_46 = arith.constant 0 : index
    %c0_47 = arith.constant 0 : index
    %165 = vector.load %arg10[%c0_45, %c0_46, %c0_47] : memref<1x16x128xbf16, #tpu.memory_space<vmem>>, vector<1x16x128xbf16>
    %166 = vector.shape_cast %165 : vector<1x16x128xbf16> to vector<16x128xbf16>
    %167 = vector.shape_cast %164 : vector<16x128xbf16> to vector<1x16x128xbf16>
    tpu.vector_store %arg10[%c0_45, %c0_46, %c0_47], %167 {strides = array<i32>} : memref<1x16x128xbf16, #tpu.memory_space<vmem>>, vector<1x16x128xbf16>,
    %cst_48 = arith.constant dense<0.000000e+00> : vector<128xf32>
    %168 = vector.multi_reduction <add>, %163, %cst_48 [0] : vector<16x128xf32> to vector<128xf32>
    %169 = vector.shape_cast %168 : vector<128xf32> to vector<1x128xf32>
    %170 = arith.mulf %163, %163 : vector<16x128xf32>
    %cst_49 = arith.constant dense<0.000000e+00> : vector<128xf32>
    %171 = vector.multi_reduction <add>, %170, %cst_49 [0] : vector<16x128xf32> to vector<128xf32>
    %172 = vector.shape_cast %171 : vector<128xf32> to vector<1x128xf32>
    %c0_i32_50 = arith.constant 0 : i32
    %173 = arith.cmpi eq, %arg1, %c0_i32_50 : i32
    %174 = arith.extui %173 : i1 to i32
    %c0_i32_51 = arith.constant 0 : i32
    %175 = arith.cmpi ne, %174, %c0_i32_51 : i32
    scf.if %175 {
      %c0_57 = arith.constant 0 : index
      %c0_58 = arith.constant 0 : index
      %c0_59 = arith.constant 0 : index
      %181 = vector.load %arg11[%c0_57, %c0_58, %c0_59] : memref<1x1x128xf32, #tpu.memory_space<vmem>>, vector<1x1x128xf32>
      %182 = vector.shape_cast %181 : vector<1x1x128xf32> to vector<1x128xf32>
      %183 = vector.shape_cast %169 : vector<1x128xf32> to vector<1x1x128xf32>
      tpu.vector_store %arg11[%c0_57, %c0_58, %c0_59], %183 {strides = array<i32>} : memref<1x1x128xf32, #tpu.memory_space<vmem>>, vector<1x1x128xf32>,
      %c0_60 = arith.constant 0 : index
      %c0_61 = arith.constant 0 : index
      %c0_62 = arith.constant 0 : index
      %184 = vector.load %arg12[%c0_60, %c0_61, %c0_62] : memref<1x1x128xf32, #tpu.memory_space<vmem>>, vector<1x1x128xf32>
      %185 = vector.shape_cast %184 : vector<1x1x128xf32> to vector<1x128xf32>
      %186 = vector.shape_cast %172 : vector<1x128xf32> to vector<1x1x128xf32>
      tpu.vector_store %arg12[%c0_60, %c0_61, %c0_62], %186 {strides = array<i32>} : memref<1x1x128xf32, #tpu.memory_space<vmem>>, vector<1x1x128xf32>,
    } else {
    }
    %c0_i32_52 = arith.constant 0 : i32
    %176 = arith.cmpi sgt, %arg1, %c0_i32_52 : i32
    %177 = arith.extui %176 : i1 to i32
    %c0_i32_53 = arith.constant 0 : i32
    %178 = arith.cmpi ne, %177, %c0_i32_53 : i32
    scf.if %178 {
      %c0_57 = arith.constant 0 : index
      %c0_58 = arith.constant 0 : index
      %c0_59 = arith.constant 0 : index
      %181 = vector.load %arg11[%c0_57, %c0_58, %c0_59] : memref<1x1x128xf32, #tpu.memory_space<vmem>>, vector<1x1x128xf32>
      %182 = vector.shape_cast %181 : vector<1x1x128xf32> to vector<1x128xf32>
      %183 = arith.addf %182, %169 : vector<1x128xf32>
      %c0_60 = arith.constant 0 : index
      %c0_61 = arith.constant 0 : index
      %c0_62 = arith.constant 0 : index
      %184 = vector.load %arg11[%c0_60, %c0_61, %c0_62] : memref<1x1x128xf32, #tpu.memory_space<vmem>>, vector<1x1x128xf32>
      %185 = vector.shape_cast %184 : vector<1x1x128xf32> to vector<1x128xf32>
      %186 = vector.shape_cast %183 : vector<1x128xf32> to vector<1x1x128xf32>
      tpu.vector_store %arg11[%c0_60, %c0_61, %c0_62], %186 {strides = array<i32>} : memref<1x1x128xf32, #tpu.memory_space<vmem>>, vector<1x1x128xf32>,
      %c0_63 = arith.constant 0 : index
      %c0_64 = arith.constant 0 : index
      %c0_65 = arith.constant 0 : index
      %187 = vector.load %arg12[%c0_63, %c0_64, %c0_65] : memref<1x1x128xf32, #tpu.memory_space<vmem>>, vector<1x1x128xf32>
      %188 = vector.shape_cast %187 : vector<1x1x128xf32> to vector<1x128xf32>
      %189 = arith.addf %188, %172 : vector<1x128xf32>
      %c0_66 = arith.constant 0 : index
      %c0_67 = arith.constant 0 : index
      %c0_68 = arith.constant 0 : index
      %190 = vector.load %arg12[%c0_66, %c0_67, %c0_68] : memref<1x1x128xf32, #tpu.memory_space<vmem>>, vector<1x1x128xf32>
      %191 = vector.shape_cast %190 : vector<1x1x128xf32> to vector<1x128xf32>
      %192 = vector.shape_cast %189 : vector<1x128xf32> to vector<1x1x128xf32>
      tpu.vector_store %arg12[%c0_66, %c0_67, %c0_68], %192 {strides = array<i32>} : memref<1x1x128xf32, #tpu.memory_space<vmem>>, vector<1x1x128xf32>,
    } else {
    }
    %c17 = arith.constant 17 : index
    %c0_54 = arith.constant 0 : index
    %179 = vector.load %arg13[%c17, %c0_54] : memref<32x128xf32, #tpu.memory_space<vmem>>, vector<7x128xf32>
    %c1_55 = arith.constant 1 : index
    %c0_56 = arith.constant 0 : index
    %180 = vector.load %arg13[%c1_55, %c0_56] : memref<32x128xf32, #tpu.memory_space<vmem>>, vector<7x128xf32>
    tpu.vector_store %arg13[%c1_55, %c0_56], %179 {strides = array<i32>} : memref<32x128xf32, #tpu.memory_space<vmem>>, vector<7x128xf32>,
    return
  }
  func.func @transform_0(%arg0: i32, %arg1: i32) -> (i32, i32, i32) {
    %c0_i32 = arith.constant 0 : i32
    %c0_i32_0 = arith.constant 0 : i32
    return %arg0, %arg1, %c0_i32 : i32, i32, i32
  }
  func.func @transform_1(%arg0: i32, %arg1: i32) -> (i32, i32, i32) {
    %c1_i32 = arith.constant 1 : i32
    %0 = arith.addi %arg1, %c1_i32 : i32
    %c2_i32 = arith.constant 2 : i32
    %1 = arith.muli %0, %c2_i32 : i32
    %c3_i32 = arith.constant 3 : i32
    %2 = arith.minsi %1, %c3_i32 : i32
    %c0_i32 = arith.constant 0 : i32
    %c0_i32_0 = arith.constant 0 : i32
    return %arg0, %2, %c0_i32 : i32, i32, i32
  }
  func.func @transform_2(%arg0: i32, %arg1: i32) -> (i32, i32) {
    %c0_i32 = arith.constant 0 : i32
    %c0_i32_0 = arith.constant 0 : i32
    %c0_i32_1 = arith.constant 0 : i32
    return %c0_i32, %c0_i32_0 : i32, i32
  }
  func.func @transform_3(%arg0: i32, %arg1: i32) -> (i32, i32) {
    %c0_i32 = arith.constant 0 : i32
    %c0_i32_0 = arith.constant 0 : i32
    %c0_i32_1 = arith.constant 0 : i32
    return %c0_i32, %c0_i32_0 : i32, i32
  }
  func.func @transform_4(%arg0: i32, %arg1: i32) -> (i32, i32) {
    %c0_i32 = arith.constant 0 : i32
    %c0_i32_0 = arith.constant 0 : i32
    %c0_i32_1 = arith.constant 0 : i32
    return %c0_i32, %c0_i32_0 : i32, i32
  }
  func.func @transform_5(%arg0: i32, %arg1: i32) -> (i32, i32) {
    %c0_i32 = arith.constant 0 : i32
    %c0_i32_0 = arith.constant 0 : i32
    %c0_i32_1 = arith.constant 0 : i32
    return %c0_i32, %c0_i32_0 : i32, i32
  }
  func.func @transform_6(%arg0: i32, %arg1: i32) -> (i32, i32) {
    %c0_i32 = arith.constant 0 : i32
    %c0_i32_0 = arith.constant 0 : i32
    %c0_i32_1 = arith.constant 0 : i32
    return %c0_i32, %c0_i32_0 : i32, i32
  }
  func.func @transform_7(%arg0: i32, %arg1: i32) -> (i32, i32) {
    %c0_i32 = arith.constant 0 : i32
    %c0_i32_0 = arith.constant 0 : i32
    %c0_i32_1 = arith.constant 0 : i32
    return %c0_i32, %c0_i32_0 : i32, i32
  }
  func.func @transform_8(%arg0: i32, %arg1: i32) -> (i32, i32, i32) {
    %c0_i32 = arith.constant 0 : i32
    %c0_i32_0 = arith.constant 0 : i32
    return %arg0, %arg1, %c0_i32 : i32, i32, i32
  }
  func.func @transform_9(%arg0: i32, %arg1: i32) -> (i32, i32, i32) {
    %c0_i32 = arith.constant 0 : i32
    %c0_i32_0 = arith.constant 0 : i32
    %c0_i32_1 = arith.constant 0 : i32
    return %arg0, %c0_i32, %c0_i32_0 : i32, i32, i32
  }
  func.func @transform_10(%arg0: i32, %arg1: i32) -> (i32, i32, i32) {
    %c0_i32 = arith.constant 0 : i32
    %c0_i32_0 = arith.constant 0 : i32
    %c0_i32_1 = arith.constant 0 : i32
    return %arg0, %c0_i32, %c0_i32_0 : i32, i32, i32
  }
}

</mosaic_0001>

<llo_original>
// kernel: tpu_custom_call.1
$region0: #{tpu_custom_call.1}
  #allocation0 [shape = 'u32[]', space=smem, size = 0x4, offset = 0x4, fixed_abs, tag = 'smem constant byte address 0x4 - core index']
  #allocation1 [shape = 'u32[144,128]{1,0:T(1,128)}', space=vmem, size = 0x12000, scoped, tag = 'internal scratch']
  #allocation2 [shape = 'f32[32,128]{1,0:T(8,128)}', space=vmem, size = 0x4000, scoped, tag = 'scratch operand']
  %s0 = inlined_call_operand.hbm [shape: f32[2,32,128], index: 0, kind: input, shape index: {}]
  %s1 = inlined_call_operand.hbm [shape: f32[2,32,128], index: 1, kind: input, shape index: {}]
  %s2 = inlined_call_operand.vmem [shape: f32[1,128], index: 2, kind: input, shape index: {}]
  %s3 = inlined_call_operand.vmem [shape: f32[1,128], index: 3, kind: input, shape index: {}]
  %s4 = inlined_call_operand.hbm [shape: bf16[128,256], index: 4, kind: input, shape index: {}]
  %s5 = inlined_call_operand.vmem [shape: f32[1,256], index: 5, kind: input, shape index: {}]
  %s6 = inlined_call_operand.vmem [shape: f32[15,128], index: 6, kind: input, shape index: {}]
  %s7 = inlined_call_operand.vmem [shape: f32[1,128], index: 7, kind: input, shape index: {}]
  %s8 = inlined_call_operand.hbm [shape: bf16[2,32,128], index: 8, kind: output, shape index: {0}]
  %s9 = inlined_call_operand.hbm [shape: f32[2,1,128], index: 9, kind: output, shape index: {1}]
  %s10 = inlined_call_operand.hbm [shape: f32[2,1,128], index: 10, kind: output, shape index: {2}]
  %11 = xla_tuple %s8, %s9, %s10
  %s12 = sld [smem:[#allocation0]]
  $region105: #{tpu_custom_call.1} parent=0
    _
  %s14 = ssub.s32 1, %s12
  %s15 = scalar_select 0, %s14, %s12
  $region1: #{tpu_custom_call.1} parent=0
    #allocation3 [shape = 'u8[16384]{0}', space=vmem, size = 0x4000, scoped, tag = 'input window, operand 0']
    #allocation4 [shape = 's32[2]{0}', space=sflag, size = 0x8, scoped, tag = 'scoped memory for tpu_custom_call.1']
    #allocation5 [shape = 's32[2]{0}', space=sflag, size = 0x8, scoped, tag = 'scoped memory for tpu_custom_call.1']
    #allocation6 [shape = 'u8[8192]{0}', space=vmem, size = 0x2000, scoped, tag = 'input window, operand 1']
    #allocation7 [shape = 's32[2]{0}', space=sflag, size = 0x8, scoped, tag = 'scoped memory for tpu_custom_call.1']
    #allocation8 [shape = 'u8[65536]{0}', space=vmem, size = 0x10000, scoped, tag = 'input window, operand 4, single buffered']
    #allocation9 [shape = 'u8[8192]{0}', space=vmem, size = 0x2000, scoped, tag = 'output window, operand 0']
    #allocation10 [shape = 'u8[1024]{0}', space=vmem, size = 0x400, scoped, tag = 'output window, operand 1']
    #allocation11 [shape = 's32[2]{0}', space=sflag, size = 0x8, scoped, tag = 'scoped memory for tpu_custom_call.1']
    #allocation12 [shape = 'u8[1024]{0}', space=vmem, size = 0x400, scoped, tag = 'output window, operand 2']
    %16 = vsyncpa [#allocation4], 0
    %s17 = scalar_lea.sflag [#allocation4], 1
    %18 = vsyncpa %s17, 0
    %19 = vsyncpa [#allocation7], 0
    %s20 = scalar_lea.sflag [#allocation7], 1
    %21 = vsyncpa %s20, 0
    %22 = vsyncpa [#allocation5], 0
    %s23 = scalar_lea.sflag [#allocation5], 1
    %24 = vsyncpa %s23, 0
    %25 = vsyncpa [#allocation11], 0
    %s26 = scalar_lea.sflag [#allocation11], 1
    %27 = vsyncpa %s26, 0
    loop: start=0, step=1, limit=6
    $region2: #{tpu_custom_call.1} parent=1 // loop_pre_header
      _
    $region3: #{tpu_custom_call.1} parent=1 // loop_header
      %s29 = sphi 0, %s33
      %p30 = scmp.ge.s32.totalorder %s29, 6
      %s36 = sphi 0, %s48
      %s37 = sphi 0, %s44
      %s38 = sphi 0, %s36
      %s39 = sphi 0, %s37
      %s40 = sphi 0, %s38
      %s41 = sphi 0, %s39
      %s53 = sphi 0, %s55
      %s56 = sphi 0, %s53
      %s57 = sphi 0, %s56
      %s73 = sphi 0, %s57
      %s89 = sphi 0, %s91
      %s92 = sphi 0, %s89
      %s93 = sphi 0, %s92
      %s109 = sphi 0, %s93
      %s113 = sphi 0, %s113
      %s115 = sphi 0, %s113
      %s116 = sphi 0, %s115
      %s130 = sphi 0, %s116
      %s134 = sphi 0, %s134
      %s136 = sphi 0, %s134
      %s137 = sphi 0, %s136
      %s151 = sphi 0, %s137
      %s155 = sphi 0, %s155
      %s157 = sphi 0, %s155
      %s158 = sphi 0, %s157
      %s172 = sphi 0, %s158
      %s176 = sphi 0, %s176
      %s178 = sphi 0, %s176
      %s179 = sphi 0, %s178
      %s193 = sphi 0, %s179
      %s197 = sphi 0, %s197
      %s199 = sphi 0, %s197
      %s200 = sphi 0, %s199
      %s214 = sphi 0, %s200
      %s218 = sphi 0, %s218
      %s220 = sphi 0, %s218
      %s221 = sphi 0, %s220
      %s235 = sphi 0, %s221
      %s243 = sphi 0, %s245
      %s246 = sphi 0, %s243
      %s247 = sphi 0, %s246
      %s263 = sphi 0, %s247
      %s269 = sphi 0, %s271
      %s272 = sphi 0, %s269
      %s273 = sphi 0, %s272
      %s289 = sphi 0, %s273
      %s295 = sphi 0, %s297
      %s298 = sphi 0, %s295
      %s299 = sphi 0, %s298
      %s315 = sphi 0, %s299
    $region4: #{tpu_custom_call.1} parent=1 // loop_header_branch
      %32 = sbr.rel (%p30) target = $region8
    $region5: #{tpu_custom_call.1} parent=1 // loop_body
      %s34 = ssub.s32 %s29, 1
      %s35 = ssub.s32 %s29, 2
      %s42 = sadd.s32 1, %s37
      %p43 = scmp.ge.s32.totalorder %s42, 2
      %s44 = scalar_select %p43, 0, %s42
      %s45 = sadd.s32 1, %s36
      %s46 = scalar_select %p43, %s45, %s36
      %p47 = scmp.ge.s32.totalorder %s46, 2
      %s48 = scalar_select %p47, 0, %s46
      %s49 = ssub.s32 %s36, %s48
      %s50 = ssub.s32 %s37, %s44
      %s51 = sor.u32 %s49, %s50
      %p52 = scmp.eq.s32.totalorder %s51, 0
      %s54 = sadd.s32 %s53, 1
      %s55 = scalar_select %p52, %s53, %s54
      %p58 = pneg %p52
      %p59 = scmp.eq.s32.totalorder %s29, 3
      %p60 = por %p58, %p59
      %p61 = scmp.ne.s32.totalorder %s53, %s56
      %p62 = scmp.eq.s32.totalorder %s29, 0
      %p63 = por %p61, %p62
      %p64 = scmp.ne.s32.totalorder %s53, %s56
      %p65 = scmp.eq.s32.totalorder %s34, 3
      %p66 = por %p64, %p65
      %p67 = scmp.ne.s32.totalorder %s56, %s57
      %p68 = scmp.eq.s32.totalorder %s34, 0
      %p69 = por %p67, %p68
      %p70 = scmp.ne.s32.totalorder %s56, %s57
      %p71 = scmp.eq.s32.totalorder %s35, 3
      %p72 = por %p70, %p71
      %p74 = scmp.ne.s32.totalorder %s57, %s73
      %p75 = scmp.eq.s32.totalorder %s35, 0
      %p76 = por %p74, %p75
      %s77 = sadd.s32 %s37, 1
      %s78 = smul.u32 %s77, 2
      %p79 = scmp.lt.s32.totalorder %s78, 3
      %s80 = scalar_select %p79, %s78, 3
      %s81 = sadd.s32 %s44, 1
      %s82 = smul.u32 %s81, 2
      %p83 = scmp.lt.s32.totalorder %s82, 3
      %s84 = scalar_select %p83, %s82, 3
      %s85 = ssub.s32 %s36, %s48
      %s86 = ssub.s32 %s80, %s84
      %s87 = sor.u32 %s85, %s86
      %p88 = scmp.eq.s32.totalorder %s87, 0
      %s90 = sadd.s32 %s89, 1
      %s91 = scalar_select %p88, %s89, %s90
      %p94 = pneg %p88
      %p95 = scmp.eq.s32.totalorder %s29, 3
      %p96 = por %p94, %p95
      %p97 = scmp.ne.s32.totalorder %s89, %s92
      %p98 = scmp.eq.s32.totalorder %s29, 0
      %p99 = por %p97, %p98
      %p100 = scmp.ne.s32.totalorder %s89, %s92
      %p101 = scmp.eq.s32.totalorder %s34, 3
      %p102 = por %p100, %p101
      %p103 = scmp.ne.s32.totalorder %s92, %s93
      %p104 = scmp.eq.s32.totalorder %s34, 0
      %p105 = por %p103, %p104
      %p106 = scmp.ne.s32.totalorder %s92, %s93
      %p107 = scmp.eq.s32.totalorder %s35, 3
      %p108 = por %p106, %p107
      %p110 = scmp.ne.s32.totalorder %s93, %s109
      %p111 = scmp.eq.s32.totalorder %s35, 0
      %p112 = por %p110, %p111
      %s114 = sadd.s32 %s113, 1
      %p117 = scmp.eq.s32.totalorder %s29, 3
      %p118 = scmp.ne.s32.totalorder %s113, %s115
      %p119 = scmp.eq.s32.totalorder %s29, 0
      %p120 = por %p118, %p119
      %p121 = scmp.ne.s32.totalorder %s113, %s115
      %p122 = scmp.eq.s32.totalorder %s34, 3
      %p123 = por %p121, %p122
      %p124 = scmp.ne.s32.totalorder %s115, %s116
      %p125 = scmp.eq.s32.totalorder %s34, 0
      %p126 = por %p124, %p125
      %p127 = scmp.ne.s32.totalorder %s115, %s116
      %p128 = scmp.eq.s32.totalorder %s35, 3
      %p129 = por %p127, %p128
      %p131 = scmp.ne.s32.totalorder %s116, %s130
      %p132 = scmp.eq.s32.totalorder %s35, 0
      %p133 = por %p131, %p132
      %s135 = sadd.s32 %s134, 1
      %p138 = scmp.eq.s32.totalorder %s29, 3
      %p139 = scmp.ne.s32.totalorder %s134, %s136
      %p140 = scmp.eq.s32.totalorder %s29, 0
      %p141 = por %p139, %p140
      %p142 = scmp.ne.s32.totalorder %s134, %s136
      %p143 = scmp.eq.s32.totalorder %s34, 3
      %p144 = por %p142, %p143
      %p145 = scmp.ne.s32.totalorder %s136, %s137
      %p146 = scmp.eq.s32.totalorder %s34, 0
      %p147 = por %p145, %p146
      %p148 = scmp.ne.s32.totalorder %s136, %s137
      %p149 = scmp.eq.s32.totalorder %s35, 3
      %p150 = por %p148, %p149
      %p152 = scmp.ne.s32.totalorder %s137, %s151
      %p153 = scmp.eq.s32.totalorder %s35, 0
      %p154 = por %p152, %p153
      %s156 = sadd.s32 %s155, 1
      %p159 = scmp.eq.s32.totalorder %s29, 3
      %p160 = scmp.ne.s32.totalorder %s155, %s157
      %p161 = scmp.eq.s32.totalorder %s29, 0
      %p162 = por %p160, %p161
      %p163 = scmp.ne.s32.totalorder %s155, %s157
      %p164 = scmp.eq.s32.totalorder %s34, 3
      %p165 = por %p163, %p164
      %p166 = scmp.ne.s32.totalorder %s157, %s158
      %p167 = scmp.eq.s32.totalorder %s34, 0
      %p168 = por %p166, %p167
      %p169 = scmp.ne.s32.totalorder %s157, %s158
      %p170 = scmp.eq.s32.totalorder %s35, 3
      %p171 = por %p169, %p170
      %p173 = scmp.ne.s32.totalorder %s158, %s172
      %p174 = scmp.eq.s32.totalorder %s35, 0
      %p175 = por %p173, %p174
      %s177 = sadd.s32 %s176, 1
      %p180 = scmp.eq.s32.totalorder %s29, 3
      %p181 = scmp.ne.s32.totalorder %s176, %s178
      %p182 = scmp.eq.s32.totalorder %s29, 0
      %p183 = por %p181, %p182
      %p184 = scmp.ne.s32.totalorder %s176, %s178
      %p185 = scmp.eq.s32.totalorder %s34, 3
      %p186 = por %p184, %p185
      %p187 = scmp.ne.s32.totalorder %s178, %s179
      %p188 = scmp.eq.s32.totalorder %s34, 0
      %p189 = por %p187, %p188
      %p190 = scmp.ne.s32.totalorder %s178, %s179
      %p191 = scmp.eq.s32.totalorder %s35, 3
      %p192 = por %p190, %p191
      %p194 = scmp.ne.s32.totalorder %s179, %s193
      %p195 = scmp.eq.s32.totalorder %s35, 0
      %p196 = por %p194, %p195
      %s198 = sadd.s32 %s197, 1
      %p201 = scmp.eq.s32.totalorder %s29, 3
      %p202 = scmp.ne.s32.totalorder %s197, %s199
      %p203 = scmp.eq.s32.totalorder %s29, 0
      %p204 = por %p202, %p203
      %p205 = scmp.ne.s32.totalorder %s197, %s199
      %p206 = scmp.eq.s32.totalorder %s34, 3
      %p207 = por %p205, %p206
      %p208 = scmp.ne.s32.totalorder %s199, %s200
      %p209 = scmp.eq.s32.totalorder %s34, 0
      %p210 = por %p208, %p209
      %p211 = scmp.ne.s32.totalorder %s199, %s200
      %p212 = scmp.eq.s32.totalorder %s35, 3
      %p213 = por %p211, %p212
      %p215 = scmp.ne.s32.totalorder %s200, %s214
      %p216 = scmp.eq.s32.totalorder %s35, 0
      %p217 = por %p215, %p216
      %s219 = sadd.s32 %s218, 1
      %p222 = scmp.eq.s32.totalorder %s29, 3
      %p223 = scmp.ne.s32.totalorder %s218, %s220
      %p224 = scmp.eq.s32.totalorder %s29, 0
      %p225 = por %p223, %p224
      %p226 = scmp.ne.s32.totalorder %s218, %s220
      %p227 = scmp.eq.s32.totalorder %s34, 3
      %p228 = por %p226, %p227
      %p229 = scmp.ne.s32.totalorder %s220, %s221
      %p230 = scmp.eq.s32.totalorder %s34, 0
      %p231 = por %p229, %p230
      %p232 = scmp.ne.s32.totalorder %s220, %s221
      %p233 = scmp.eq.s32.totalorder %s35, 3
      %p234 = por %p232, %p233
      %p236 = scmp.ne.s32.totalorder %s221, %s235
      %p237 = scmp.eq.s32.totalorder %s35, 0
      %p238 = por %p236, %p237
      %s239 = ssub.s32 %s36, %s48
      %s240 = ssub.s32 %s37, %s44
      %s241 = sor.u32 %s239, %s240
      %p242 = scmp.eq.s32.totalorder %s241, 0
      %s244 = sadd.s32 %s243, 1
      %s245 = scalar_select %p242, %s243, %s244
      %p248 = pneg %p242
      %p249 = scmp.eq.s32.totalorder %s29, 3
      %p250 = por %p248, %p249
      %p251 = scmp.ne.s32.totalorder %s243, %s246
      %p252 = scmp.eq.s32.totalorder %s29, 0
      %p253 = por %p251, %p252
      %p254 = scmp.ne.s32.totalorder %s243, %s246
      %p255 = scmp.eq.s32.totalorder %s34, 3
      %p256 = por %p254, %p255
      %p257 = scmp.ne.s32.totalorder %s246, %s247
      %p258 = scmp.eq.s32.totalorder %s34, 0
      %p259 = por %p257, %p258
      %p260 = scmp.ne.s32.totalorder %s246, %s247
      %p261 = scmp.eq.s32.totalorder %s35, 3
      %p262 = por %p260, %p261
      %p264 = scmp.ne.s32.totalorder %s247, %s263
      %p265 = scmp.eq.s32.totalorder %s35, 0
      %p266 = por %p264, %p265
      %s267 = ssub.s32 %s36, %s48
      %p268 = scmp.eq.s32.totalorder %s267, 0
      %s270 = sadd.s32 %s269, 1
      %s271 = scalar_select %p268, %s269, %s270
      %p274 = pneg %p268
      %p275 = scmp.eq.s32.totalorder %s29, 3
      %p276 = por %p274, %p275
      %p277 = scmp.ne.s32.totalorder %s269, %s272
      %p278 = scmp.eq.s32.totalorder %s29, 0
      %p279 = por %p277, %p278
      %p280 = scmp.ne.s32.totalorder %s269, %s272
      %p281 = scmp.eq.s32.totalorder %s34, 3
      %p282 = por %p280, %p281
      %p283 = scmp.ne.s32.totalorder %s272, %s273
      %p284 = scmp.eq.s32.totalorder %s34, 0
      %p285 = por %p283, %p284
      %p286 = scmp.ne.s32.totalorder %s272, %s273
      %p287 = scmp.eq.s32.totalorder %s35, 3
      %p288 = por %p286, %p287
      %p290 = scmp.ne.s32.totalorder %s273, %s289
      %p291 = scmp.eq.s32.totalorder %s35, 0
      %p292 = por %p290, %p291
      %s293 = ssub.s32 %s36, %s48
      %p294 = scmp.eq.s32.totalorder %s293, 0
      %s296 = sadd.s32 %s295, 1
      %s297 = scalar_select %p294, %s295, %s296
      %p300 = pneg %p294
      %p301 = scmp.eq.s32.totalorder %s29, 3
      %p302 = por %p300, %p301
      %p303 = scmp.ne.s32.totalorder %s295, %s298
      %p304 = scmp.eq.s32.totalorder %s29, 0
      %p305 = por %p303, %p304
      %p306 = scmp.ne.s32.totalorder %s295, %s298
      %p307 = scmp.eq.s32.totalorder %s34, 3
      %p308 = por %p306, %p307
      %p309 = scmp.ne.s32.totalorder %s298, %s299
      %p310 = scmp.eq.s32.totalorder %s34, 0
      %p311 = por %p309, %p310
      %p312 = scmp.ne.s32.totalorder %s298, %s299
      %p313 = scmp.eq.s32.totalorder %s35, 3
      %p314 = por %p312, %p313
      %p316 = scmp.ne.s32.totalorder %s299, %s315
      %p317 = scmp.eq.s32.totalorder %s35, 0
      %p318 = por %p316, %p317
      %p319 = scmp.le.s32.totalorder 1, %s29
      %p320 = scmp.lt.s32.totalorder %s29, 5
      %p321 = pnand %p319, %p320
      %p322 = pneg %p321
      // Predicated region
      $region9: #{tpu_custom_call.1} parent=5 // pred_check
        _
      $region10: #{tpu_custom_call.1} parent=5 // pred_check_branch
        %324 = sbr.rel (%p321) target = $region12
      $region11: #{tpu_custom_call.1} parent=5 // pred_region
        %s325 = ssub.s32 %s29, 1
        // Predicated region
        $region13: #{tpu_custom_call.1} parent=11 // pred_check
          %p326 = pneg %p126
        $region14: #{tpu_custom_call.1} parent=11 // pred_check_branch
          %328 = sbr.rel (%p326) target = $region16
        $region15: #{tpu_custom_call.1} parent=11 // pred_region
          _
        $region16: #{tpu_custom_call.1} parent=11 // pred_fallthru
          _
        // Predicated region
        $region17: #{tpu_custom_call.1} parent=11 // pred_check
          %p329 = pneg %p147
        $region18: #{tpu_custom_call.1} parent=11 // pred_check_branch
          %331 = sbr.rel (%p329) target = $region20
        $region19: #{tpu_custom_call.1} parent=11 // pred_region
          _
        $region20: #{tpu_custom_call.1} parent=11 // pred_fallthru
          _
        // Predicated region
        $region21: #{tpu_custom_call.1} parent=11 // pred_check
          %p332 = pneg %p168
        $region22: #{tpu_custom_call.1} parent=11 // pred_check_branch
          %334 = sbr.rel (%p332) target = $region24
        $region23: #{tpu_custom_call.1} parent=11 // pred_region
          %s336 = ssub.s32 2048, 2048
          %337 = vsyncadd [#allocation7], %s336
          %s338 = sshll.u32 [#allocation8], 4
          %s339 = int_to_ptr.vmem [resolvable:$true] %s338
          %344 = dma.hbm_to_vmem [thread:$0]  %s4, 2048, %s339, [#allocation7], 128, 128, 8
        $region24: #{tpu_custom_call.1} parent=11 // pred_fallthru
          _
        // Predicated region
        $region25: #{tpu_custom_call.1} parent=11 // pred_check
          %p345 = pneg %p189
        $region26: #{tpu_custom_call.1} parent=11 // pred_check_branch
          %347 = sbr.rel (%p345) target = $region28
        $region27: #{tpu_custom_call.1} parent=11 // pred_region
          _
        $region28: #{tpu_custom_call.1} parent=11 // pred_fallthru
          _
        // Predicated region
        $region29: #{tpu_custom_call.1} parent=11 // pred_check
          %p348 = pneg %p210
        $region30: #{tpu_custom_call.1} parent=11 // pred_check_branch
          %350 = sbr.rel (%p348) target = $region32
        $region31: #{tpu_custom_call.1} parent=11 // pred_region
          _
        $region32: #{tpu_custom_call.1} parent=11 // pred_fallthru
          _
        // Predicated region
        $region33: #{tpu_custom_call.1} parent=11 // pred_check
          %p351 = pneg %p231
        $region34: #{tpu_custom_call.1} parent=11 // pred_check_branch
          %353 = sbr.rel (%p351) target = $region36
        $region35: #{tpu_custom_call.1} parent=11 // pred_region
          _
        $region36: #{tpu_custom_call.1} parent=11 // pred_fallthru
          _
      $region12: #{tpu_custom_call.1} parent=5 // pred_fallthru
        _
      %p354 = scmp.lt.s32.totalorder %s29, 4
      // Predicated region
      $region37: #{tpu_custom_call.1} parent=5 // pred_check
        %p355 = pneg %p354
      $region38: #{tpu_custom_call.1} parent=5 // pred_check_branch
        %357 = sbr.rel (%p355) target = $region40
      $region39: #{tpu_custom_call.1} parent=5 // pred_region
        // Predicated region
        $region41: #{tpu_custom_call.1} parent=39 // pred_check
          %p358 = pneg %p63
        $region42: #{tpu_custom_call.1} parent=39 // pred_check_branch
          %360 = sbr.rel (%p358) target = $region44
        $region43: #{tpu_custom_call.1} parent=39 // pred_region
          %s361 = sand.u32 %s53, 1
          %s362 = scalar_lea.sflag [#allocation4], %s361
          %s363 = sand.u32 %s53, 1
          %s364 = smul.addr %s363, 16
          %s365 = scalar_lea.vmem [#allocation3], %s364
          %s366 = smul.u32 2, %s37
          %s368 = ssub.s32 256, 256
          %369 = vsyncadd %s362, %s368
          %s370 = smul.addr %s36, 4
          %s371 = sadd.s32 %s366, %s370
          %s372 = smul.addr %s371, 128
          %s373 = scalar_lea.hbm %s0, %s372
          %s374 = sshll.u32 %s365, 4
          %s375 = int_to_ptr.vmem [resolvable:$true] %s374
          %380 = dma.hbm_to_vmem [thread:$0]  %s373, 256, %s375, %s362, 128, 128, 8
        $region44: #{tpu_custom_call.1} parent=39 // pred_fallthru
          _
        // Predicated region
        $region45: #{tpu_custom_call.1} parent=39 // pred_check
          %p381 = pneg %p99
        $region46: #{tpu_custom_call.1} parent=39 // pred_check_branch
          %383 = sbr.rel (%p381) target = $region48
        $region47: #{tpu_custom_call.1} parent=39 // pred_region
          %s384 = sand.u32 %s29, 1
          %s385 = scalar_lea.sflag [#allocation7], %s384
          %s386 = sand.u32 %s89, 1
          %s387 = smul.addr %s386, 8
          %s388 = scalar_lea.vmem [#allocation6], %s387
          %s389 = sadd.s32 %s37, 1
          %s390 = smul.u32 %s389, 2
          %p391 = scmp.lt.s32.totalorder %s390, 3
          %s392 = scalar_select %p391, %s390, 3
          %s394 = ssub.s32 128, 128
          %395 = vsyncadd %s385, %s394
          %s396 = smul.addr %s36, 4
          %s397 = sadd.s32 %s392, %s396
          %s398 = smul.addr %s397, 128
          %s399 = scalar_lea.hbm %s1, %s398
          %s401 = sshll.u32 %s388, 4
          %s402 = int_to_ptr.vmem [resolvable:$true] %s401
          %404 = dma.hbm_to_vmem [thread:$0]  %s399, 128, %s402, %s385
        $region48: #{tpu_custom_call.1} parent=39 // pred_fallthru
          _
      $region40: #{tpu_custom_call.1} parent=5 // pred_fallthru
        _
      %p405 = scmp.le.s32.totalorder 1, %s29
      %p406 = scmp.lt.s32.totalorder %s29, 5
      %p407 = pnand %p405, %p406
      %p408 = pneg %p407
      // Predicated region
      $region49: #{tpu_custom_call.1} parent=5 // pred_check
        _
      $region50: #{tpu_custom_call.1} parent=5 // pred_check_branch
        %410 = sbr.rel (%p407) target = $region52
      $region51: #{tpu_custom_call.1} parent=5 // pred_region
        %s411 = ssub.s32 %s29, 1
        %s412 = sand.u32 %s56, 1
        %s413 = scalar_lea.sflag [#allocation4], %s412
        %s414 = sand.u32 %s56, 1
        %s415 = smul.addr %s414, 16
        %s416 = scalar_lea.vmem [#allocation3], %s415
        // Predicated region
        $region53: #{tpu_custom_call.1} parent=51 // pred_check
          %p417 = pneg %p69
        $region54: #{tpu_custom_call.1} parent=51 // pred_check_branch
          %419 = sbr.rel (%p417) target = $region56
        $region55: #{tpu_custom_call.1} parent=51 // pred_region
          %420 = dma.done %s413, 256
        $region56: #{tpu_custom_call.1} parent=51 // pred_fallthru
          _
        %s421 = sand.u32 %s34, 1
        %s422 = scalar_lea.sflag [#allocation7], %s421
        %s423 = sand.u32 %s92, 1
        %s424 = smul.addr %s423, 8
        %s425 = scalar_lea.vmem [#allocation6], %s424
        // Predicated region
        $region57: #{tpu_custom_call.1} parent=51 // pred_check
          %p426 = pneg %p105
        $region58: #{tpu_custom_call.1} parent=51 // pred_check_branch
          %428 = sbr.rel (%p426) target = $region60
        $region59: #{tpu_custom_call.1} parent=51 // pred_region
          %429 = dma.done %s422, 128
        $region60: #{tpu_custom_call.1} parent=51 // pred_fallthru
          _
        // Predicated region
        $region61: #{tpu_custom_call.1} parent=51 // pred_check
          %p430 = pneg %p168
        $region62: #{tpu_custom_call.1} parent=51 // pred_check_branch
          %432 = sbr.rel (%p430) target = $region64
        $region63: #{tpu_custom_call.1} parent=51 // pred_region
          %433 = dma.done [#allocation7], 2048
        $region64: #{tpu_custom_call.1} parent=51 // pred_fallthru
          _
        %s434 = sand.u32 %s56, 1
        %s435 = scalar_lea.sflag [#allocation4], %s434
        %s436 = sand.u32 %s56, 1
        %s437 = smul.addr %s436, 16
        %s438 = scalar_lea.vmem [#allocation3], %s437
        %p439 = pneg %p69
        %p440 = pneg %p66
        %s441 = sand.u32 %s34, 1
        %s442 = scalar_lea.sflag [#allocation7], %s441
        %s443 = sand.u32 %s92, 1
        %s444 = smul.addr %s443, 8
        %s445 = scalar_lea.vmem [#allocation6], %s444
        %p446 = pneg %p105
        %p447 = pneg %p102
        %p448 = pneg %p126
        %p449 = pneg %p123
        %p450 = pneg %p147
        %p451 = pneg %p144
        %p452 = pneg %p168
        %p453 = pneg %p165
        %p454 = pneg %p189
        %p455 = pneg %p186
        %p456 = pneg %p210
        %p457 = pneg %p207
        %p458 = pneg %p231
        %p459 = pneg %p228
        %p460 = pneg %p259
        %p461 = pneg %p256
        %s462 = sand.u32 %s246, 1
        %s463 = scalar_lea.sflag [#allocation5], %s462
        %s464 = sand.u32 %s246, 1
        %s465 = smul.addr %s464, 8
        %s466 = scalar_lea.vmem [#allocation9], %s465
        %p467 = pneg %p285
        %p468 = pneg %p282
        %s469 = sand.u32 %s34, 1
        %s470 = scalar_lea.sflag [#allocation11], %s469
        %s471 = sand.u32 %s272, 1
        %s472 = scalar_lea.vmem [#allocation10], %s471
        %p473 = pneg %p311
        %p474 = pneg %p308
        %s475 = sand.u32 %s34, 1
        %s476 = scalar_lea.sflag [#allocation11], %s475
        %s477 = sand.u32 %s298, 1
        %s478 = scalar_lea.vmem [#allocation12], %s477
        %s479 = smul.u32 2, %s39
        %s480 = sadd.s32 %s39, 1
        %s481 = smul.u32 %s480, 2
        %p482 = scmp.lt.s32.totalorder %s481, 3
        %s483 = scalar_select %p482, %s481, 3
        %s484 = smul.u32 2, %s39
        %v486 = vld [vmem:[%s2] sm:$0x1]
        %v487 = vld [vmem:[%s3] sm:$0x1]
        %v488 = vld [vmem:[#allocation8] sm:$0xff]
        %v489 = vld [vmem:[#allocation8 + $0x8] sm:$0xff]
        %v490 = vld [vmem:[#allocation8 + $0x10] sm:$0xff]
        %v491 = vld [vmem:[#allocation8 + $0x18] sm:$0xff]
        %v492 = vld [vmem:[#allocation8 + $0x20] sm:$0xff]
        %v493 = vld [vmem:[#allocation8 + $0x28] sm:$0xff]
        %v494 = vld [vmem:[#allocation8 + $0x30] sm:$0xff]
        %v495 = vld [vmem:[#allocation8 + $0x38] sm:$0xff]
        %v496 = vld [vmem:[#allocation8 + $0x40] sm:$0xff]
        %v497 = vld [vmem:[#allocation8 + $0x48] sm:$0xff]
        %v498 = vld [vmem:[#allocation8 + $0x50] sm:$0xff]
        %v499 = vld [vmem:[#allocation8 + $0x58] sm:$0xff]
        %v500 = vld [vmem:[#allocation8 + $0x60] sm:$0xff]
        %v501 = vld [vmem:[#allocation8 + $0x68] sm:$0xff]
        %v502 = vld [vmem:[#allocation8 + $0x70] sm:$0xff]
        %v503 = vld [vmem:[#allocation8 + $0x78] sm:$0xff]
        %v504 = vld [vmem:[%s5] sm:$0x3]
        %v505 = vld [vmem:[%s6] sm:$0xff]
        %v506 = vld [vmem:[%s6 + $0x8] sm:$0x7f]
        %v507 = vld [vmem:[%s7] sm:$0x1]
        %p508 = scmp.eq.s32.totalorder %s39, 0
        // Predicated region
        $region65: #{tpu_custom_call.1} parent=51 // pred_check
          %p509 = pneg %p508
        $region66: #{tpu_custom_call.1} parent=51 // pred_check_branch
          %511 = sbr.rel (%p509) target = $region68
        $region67: #{tpu_custom_call.1} parent=51 // pred_region
          %512 = vst [vmem:[#allocation2 + $0x1] sm:$0x7f] 0.0
        $region68: #{tpu_custom_call.1} parent=51 // pred_fallthru
          _
        %v513 = vld [vmem:[%s416] sm:$0xff]
        %v514 = vld [vmem:[%s416 + $0x8] sm:$0xff]
        %v515 = vld [vmem:[%s425] sm:$0xff]
        %516 = vadd.xlane.f32.xlu0 %v513
        %v517 = vpop.xlane.xlu0 %516
        %518 = vadd.xlane.f32.xlu0 %v514
        %v519 = vpop.xlane.xlu0 %518
        %520 = vadd.xlane.f32.xlu0 %v515
        %v521 = vpop.xlane.xlu0 %520
        %v522 = vrcp.pop 128.0
        %v523 = vmul.f32 %v517, %v522
        %v524 = vmul.f32 %v519, %v522
        %v525 = vmul.f32 %v521, %v522
        %v526 = vsub.f32 %v513, %v523
        %v527 = vsub.f32 %v514, %v524
        %v528 = vsub.f32 %v515, %v525
        %v529 = vmul.f32 %v526, %v526
        %v530 = vmul.f32 %v527, %v527
        %v531 = vmul.f32 %v528, %v528
        %532 = vadd.xlane.f32.xlu0 %v529
        %v533 = vpop.xlane.xlu0 %532
        %534 = vadd.xlane.f32.xlu0 %v530
        %v535 = vpop.xlane.xlu0 %534
        %536 = vadd.xlane.f32.xlu0 %v531
        %v537 = vpop.xlane.xlu0 %536
        %v538 = vmul.f32 %v533, %v522
        %v539 = vmul.f32 %v535, %v522
        %v540 = vmul.f32 %v537, %v522
        %v541 = vadd.f32 %v538, 1e-05
        %v542 = vadd.f32 %v539, 1e-05
        %v543 = vadd.f32 %v540, 1e-05
        %v544 = vrsqrt.pop %v541
        %v545 = vrsqrt.pop %v542
        %v546 = vrsqrt.pop %v543
        %v547 = vmul.f32 %v526, %v544
        %v548 = vmul.f32 %v527, %v545
        %v549 = vmul.f32 %v528, %v546
        %v551 = vlaneseq
        %v552 = vshrl.u32 %v551, 7
        %v553 = vsub.s32 0, %v552
        %v554 = vrot.slane %v486, %v553
        %v556 = vmul.f32 %v547, %v554
        %v557 = vmul.f32 %v548, %v554
        %v558 = vmul.f32 %v549, %v554
        %v560 = vlaneseq
        %v561 = vshrl.u32 %v560, 7
        %v562 = vsub.s32 0, %v561
        %v563 = vrot.slane %v487, %v562
        %v565 = vadd.f32 %v556, %v563
        %v566 = vadd.f32 %v557, %v563
        %v567 = vadd.f32 %v558, %v563
        %v568 = vpack.c.bf16 %v566, %v565
        %v569 = vpack.c.bf16 %v567, %v567
        %v571 = vlaneseq
        %v572 = vshrl.u32 %v571, 7
        %v573 = vsub.s32 0, %v572
        %v574 = vrot.slane %v504, %v573
        %v575 = vlaneseq
        %v576 = vshrl.u32 %v575, 7
        %v577 = vsub.s32 1, %v576
        %v578 = vrot.slane %v504, %v577
        %v597 = vunpack.c.l.b16 %v488
        %v598 = vunpack.c.h.b16 %v488
        %v599 = vunpack.c.l.b16 %v489
        %v600 = vunpack.c.h.b16 %v489
        %v601 = vunpack.c.l.b16 %v490
        %v602 = vunpack.c.h.b16 %v490
        %v603 = vunpack.c.l.b16 %v491
        %v604 = vunpack.c.h.b16 %v491
        %v605 = vunpack.c.l.b16 %v492
        %v606 = vunpack.c.h.b16 %v492
        %v607 = vunpack.c.l.b16 %v493
        %v608 = vunpack.c.h.b16 %v493
        %v609 = vunpack.c.l.b16 %v494
        %v610 = vunpack.c.h.b16 %v494
        %v611 = vunpack.c.l.b16 %v495
        %v612 = vunpack.c.h.b16 %v495
        %v613 = vunpack.c.l.b16 %v496
        %v614 = vunpack.c.h.b16 %v496
        %v615 = vunpack.c.l.b16 %v497
        %v616 = vunpack.c.h.b16 %v497
        %v617 = vunpack.c.l.b16 %v498
        %v618 = vunpack.c.h.b16 %v498
        %v619 = vunpack.c.l.b16 %v499
        %v620 = vunpack.c.h.b16 %v499
        %v621 = vunpack.c.l.b16 %v500
        %v622 = vunpack.c.h.b16 %v500
        %v623 = vunpack.c.l.b16 %v501
        %v624 = vunpack.c.h.b16 %v501
        %v625 = vunpack.c.l.b16 %v502
        %v626 = vunpack.c.h.b16 %v502
        %v627 = vunpack.c.l.b16 %v503
        %v628 = vunpack.c.h.b16 %v503
        %v629 = vpack.c.b16 %v599, %v597
        %v630 = vpack.c.b16 %v600, %v598
        %v631 = vpack.c.b16 %v603, %v601
        %v632 = vpack.c.b16 %v604, %v602
        %v633 = vpack.c.b16 %v607, %v605
        %v634 = vpack.c.b16 %v608, %v606
        %v635 = vpack.c.b16 %v611, %v609
        %v636 = vpack.c.b16 %v612, %v610
        %v637 = vpack.c.b16 %v615, %v613
        %v638 = vpack.c.b16 %v616, %v614
        %v639 = vpack.c.b16 %v619, %v617
        %v640 = vpack.c.b16 %v620, %v618
        %v641 = vpack.c.b16 %v623, %v621
        %v642 = vpack.c.b16 %v624, %v622
        %v643 = vpack.c.b16 %v627, %v625
        %v644 = vpack.c.b16 %v628, %v626
        %661 = vmatprep.subr.bf16.mxu0 %v630
        %662 = vmatpush1.bf16.msra.mxu0 %v629
        %663 = vmatprep.subr.bf16.mxu0 %v632
        %664 = vmatpush1.bf16.msra.mxu0 %v631
        %665 = vmatprep.subr.bf16.mxu0 %v634
        %666 = vmatpush1.bf16.msra.mxu0 %v633
        %667 = vmatprep.subr.bf16.mxu0 %v636
        %668 = vmatpush1.bf16.msra.mxu0 %v635
        %669 = vmatprep.subr.bf16.mxu0 %v638
        %670 = vmatpush1.bf16.msra.mxu0 %v637
        %671 = vmatprep.subr.bf16.mxu0 %v640
        %672 = vmatpush1.bf16.msra.mxu0 %v639
        %673 = vmatprep.subr.bf16.mxu0 %v642
        %674 = vmatpush1.bf16.msra.mxu0 %v641
        %675 = vmatprep.subr.bf16.mxu0 %v644
        %676 = vmatpush1.bf16.msra.mxu0 %v643
        %677 = vmatprep.subr.bf16.mxu0 0
        %678 = vmatpush1.bf16.msra.mxu0 0
        %679 = vmatprep.subr.bf16.mxu0 0
        %680 = vmatpush1.bf16.msra.mxu0 0
        %681 = vmatprep.subr.bf16.mxu0 0
        %682 = vmatpush1.bf16.msra.mxu0 0
        %683 = vmatprep.subr.bf16.mxu0 0
        %684 = vmatpush1.bf16.msra.mxu0 0
        %685 = vmatprep.subr.bf16.mxu0 0
        %686 = vmatpush1.bf16.msra.mxu0 0
        %687 = vmatprep.subr.bf16.mxu0 0
        %688 = vmatpush1.bf16.msra.mxu0 0
        %689 = vmatprep.subr.bf16.mxu0 0
        %690 = vmatpush1.bf16.msra.mxu0 0
        %691 = vmatprep.subr.bf16.mxu0 0
        %692 = vmatpush1.bf16.msra.mxu0 0
        %693 = vmatprep.mubr.bf16.mxu0 0
        %694 = vmatmul.mubr.bf16.gmra.mrb[0].mxu0 %v568
        %v695 = vpop.f32.mrb[0].mxu0
        %v696 = vadd.f32 %v574, %v695
        %v697 = vpop.f32.mrb[0].mxu0
        %v698 = vadd.f32 %v578, %v697
        %v699 = vpop.f32.mrb[0].mxu0
        %v700 = vadd.f32 %v574, %v699
        %v701 = vpop.f32.mrb[0].mxu0
        %v702 = vadd.f32 %v578, %v701
        %703 = vmatprep.mubr.bf16.mxu0 0
        %704 = vmatmul.mubr.bf16.gmra.mrb[0].mxu0 %v569
        %v705 = vpop.f32.mrb[0].mxu0
        %v706 = vadd.f32 %v574, %v705
        %v707 = vpop.f32.mrb[0].mxu0
        %v708 = vadd.f32 %v578, %v707
        %v709 = vpop.f32.mrb[0].mxu0
        %v710 = vpop.f32.mrb[0].mxu0
        %711 = vdwg.mxu0
        %v712 = vsub.f32 0.0, %v698
        %v713 = vsub.f32 0.0, %v702
        %v714 = vsub.f32 0.0, %v708
        %v715 = vmul.f32 %v712, 1.442695
        %v716 = vpow.pop %v715
        %v717 = vmul.f32 %v713, 1.442695
        %v718 = vpow.pop %v717
        %v719 = vmul.f32 %v714, 1.442695
        %v720 = vpow.pop %v719
        %v721 = vadd.f32 %v716, 1.0
        %v722 = vadd.f32 %v718, 1.0
        %v723 = vadd.f32 %v720, 1.0
        %v724 = vrcp.pop %v721
        %v725 = vrcp.pop %v722
        %v726 = vrcp.pop %v723
        %v727 = vmul.f32 %v696, %v724
        %v728 = vmul.f32 %v700, %v725
        %v729 = vmul.f32 %v706, %v726
        %730 = vst [vmem:[#allocation2 + $0x8] sm:$0xff] %v727
        %731 = vst [vmem:[#allocation2 + $0x10] sm:$0xff] %v728
        %p732 = scmp.lt.s32.totalorder %s39, 1
        %s733 = scalar_select %p732, 1, 0
        %v734 = vstv %s733
        %vm735 = vcmp.eq.s32.totalorder %v734, 1
        %v736 = vsel %vm735, %v729, 0.0
        %737 = vst [vmem:[#allocation2 + $0x18] sm:$0x7f] %v736
        %v738 = vld [vmem:[#allocation2 + $0x1] sm:$0xff]
        %v739 = vld [vmem:[#allocation2 + $0x9] sm:$0xff]
        %v740 = vlaneseq
        %v741 = vshrl.u32 %v740, 7
        %v742 = vsub.s32 0, %v741
        %v743 = vrot.slane %v505, %v742
        %v744 = vmul.f32 %v738, %v743
        %v745 = vmul.f32 %v739, %v743
        %v746 = vadd.f32 %v744, 0.0
        %v747 = vadd.f32 %v745, 0.0
        %v748 = vld [vmem:[#allocation2 + $0x2] sm:$0xff]
        %v749 = vld [vmem:[#allocation2 + $0xa] sm:$0xff]
        %v750 = vlaneseq
        %v751 = vshrl.u32 %v750, 7
        %v752 = vsub.s32 1, %v751
        %v753 = vrot.slane %v505, %v752
        %v754 = vmul.f32 %v748, %v753
        %v755 = vmul.f32 %v749, %v753
        %v756 = vadd.f32 %v746, %v754
        %v757 = vadd.f32 %v747, %v755
        %v758 = vld [vmem:[#allocation2 + $0x3] sm:$0xff]
        %v759 = vld [vmem:[#allocation2 + $0xb] sm:$0xff]
        %v760 = vlaneseq
        %v761 = vshrl.u32 %v760, 7
        %v762 = vsub.s32 2, %v761
        %v763 = vrot.slane %v505, %v762
        %v764 = vmul.f32 %v758, %v763
        %v765 = vmul.f32 %v759, %v763
        %v766 = vadd.f32 %v756, %v764
        %v767 = vadd.f32 %v757, %v765
        %v768 = vld [vmem:[#allocation2 + $0x4] sm:$0xff]
        %v769 = vld [vmem:[#allocation2 + $0xc] sm:$0xff]
        %v770 = vlaneseq
        %v771 = vshrl.u32 %v770, 7
        %v772 = vsub.s32 3, %v771
        %v773 = vrot.slane %v505, %v772
        %v774 = vmul.f32 %v768, %v773
        %v775 = vmul.f32 %v769, %v773
        %v776 = vadd.f32 %v766, %v774
        %v777 = vadd.f32 %v767, %v775
        %v778 = vld [vmem:[#allocation2 + $0x5] sm:$0xff]
        %v779 = vld [vmem:[#allocation2 + $0xd] sm:$0xff]
        %v780 = vlaneseq
        %v781 = vshrl.u32 %v780, 7
        %v782 = vsub.s32 4, %v781
        %v783 = vrot.slane %v505, %v782
        %v784 = vmul.f32 %v778, %v783
        %v785 = vmul.f32 %v779, %v783
        %v786 = vadd.f32 %v776, %v784
        %v787 = vadd.f32 %v777, %v785
        %v788 = vld [vmem:[#allocation2 + $0x6] sm:$0xff]
        %v789 = vld [vmem:[#allocation2 + $0xe] sm:$0xff]
        %v790 = vlaneseq
        %v791 = vshrl.u32 %v790, 7
        %v792 = vsub.s32 5, %v791
        %v793 = vrot.slane %v505, %v792
        %v794 = vmul.f32 %v788, %v793
        %v795 = vmul.f32 %v789, %v793
        %v796 = vadd.f32 %v786, %v794
        %v797 = vadd.f32 %v787, %v795
        %v798 = vld [vmem:[#allocation2 + $0x7] sm:$0xff]
        %v799 = vld [vmem:[#allocation2 + $0xf] sm:$0xff]
        %v800 = vlaneseq
        %v801 = vshrl.u32 %v800, 7
        %v802 = vsub.s32 6, %v801
        %v803 = vrot.slane %v505, %v802
        %v804 = vmul.f32 %v798, %v803
        %v805 = vmul.f32 %v799, %v803
        %v806 = vadd.f32 %v796, %v804
        %v807 = vadd.f32 %v797, %v805
        %v808 = vld [vmem:[#allocation2 + $0x8] sm:$0xff]
        %v809 = vld [vmem:[#allocation2 + $0x10] sm:$0xff]
        %v810 = vlaneseq
        %v811 = vshrl.u32 %v810, 7
        %v812 = vsub.s32 7, %v811
        %v813 = vrot.slane %v505, %v812
        %v814 = vmul.f32 %v808, %v813
        %v815 = vmul.f32 %v809, %v813
        %v816 = vadd.f32 %v806, %v814
        %v817 = vadd.f32 %v807, %v815
        %v818 = vld [vmem:[#allocation2 + $0x11] sm:$0xff]
        %v819 = vlaneseq
        %v820 = vshrl.u32 %v819, 7
        %v821 = vsub.s32 0, %v820
        %v822 = vrot.slane %v506, %v821
        %v823 = vmul.f32 %v739, %v822
        %v824 = vmul.f32 %v818, %v822
        %v825 = vadd.f32 %v816, %v823
        %v826 = vadd.f32 %v817, %v824
        %v827 = vld [vmem:[#allocation2 + $0x12] sm:$0xff]
        %v828 = vlaneseq
        %v829 = vshrl.u32 %v828, 7
        %v830 = vsub.s32 1, %v829
        %v831 = vrot.slane %v506, %v830
        %v832 = vmul.f32 %v749, %v831
        %v833 = vmul.f32 %v827, %v831
        %v834 = vadd.f32 %v825, %v832
        %v835 = vadd.f32 %v826, %v833
        %v836 = vld [vmem:[#allocation2 + $0x13] sm:$0xff]
        %v837 = vlaneseq
        %v838 = vshrl.u32 %v837, 7
        %v839 = vsub.s32 2, %v838
        %v840 = vrot.slane %v506, %v839
        %v841 = vmul.f32 %v759, %v840
        %v842 = vmul.f32 %v836, %v840
        %v843 = vadd.f32 %v834, %v841
        %v844 = vadd.f32 %v835, %v842
        %v845 = vld [vmem:[#allocation2 + $0x14] sm:$0xff]
        %v846 = vlaneseq
        %v847 = vshrl.u32 %v846, 7
        %v848 = vsub.s32 3, %v847
        %v849 = vrot.slane %v506, %v848
        %v850 = vmul.f32 %v769, %v849
        %v851 = vmul.f32 %v845, %v849
        %v852 = vadd.f32 %v843, %v850
        %v853 = vadd.f32 %v844, %v851
        %v854 = vld [vmem:[#allocation2 + $0x15] sm:$0xff]
        %v855 = vlaneseq
        %v856 = vshrl.u32 %v855, 7
        %v857 = vsub.s32 4, %v856
        %v858 = vrot.slane %v506, %v857
        %v859 = vmul.f32 %v779, %v858
        %v860 = vmul.f32 %v854, %v858
        %v861 = vadd.f32 %v852, %v859
        %v862 = vadd.f32 %v853, %v860
        %v863 = vld [vmem:[#allocation2 + $0x16] sm:$0xff]
        %v864 = vlaneseq
        %v865 = vshrl.u32 %v864, 7
        %v866 = vsub.s32 5, %v865
        %v867 = vrot.slane %v506, %v866
        %v868 = vmul.f32 %v789, %v867
        %v869 = vmul.f32 %v863, %v867
        %v870 = vadd.f32 %v861, %v868
        %v871 = vadd.f32 %v862, %v869
        %v872 = vld [vmem:[#allocation2 + $0x17] sm:$0xff]
        %v873 = vlaneseq
        %v874 = vshrl.u32 %v873, 7
        %v875 = vsub.s32 6, %v874
        %v876 = vrot.slane %v506, %v875
        %v877 = vmul.f32 %v799, %v876
        %v878 = vmul.f32 %v872, %v876
        %v879 = vadd.f32 %v870, %v877
        %v880 = vadd.f32 %v871, %v878
        %v882 = vlaneseq
        %v883 = vshrl.u32 %v882, 7
        %v884 = vsub.s32 0, %v883
        %v885 = vrot.slane %v507, %v884
        %v887 = vadd.f32 %v879, %v885
        %v888 = vadd.f32 %v880, %v885
        %v889 = vpack.c.bf16 %v888, %v887
        %v891 = vunpack.c.l.b16 %v889
        %v892 = vunpack.c.h.b16 %v889
        %v893 = vpack.c.b16 %v891, %v891
        %v894 = vpack.c.b16 %v892, %v892
        %897 = vst [vmem:[%s466] sm:$0xf] %v893
        %898 = vst [vmem:[%s466 + $0x4] sm:$0xf] %v894
        %v899 = vadd.f32 %v887, %v888
        %v900 = vrot.slane %v899, 4
        %v901 = vadd.f32 %v899, %v900
        %v902 = vrot.slane %v901, 2
        %v903 = vadd.f32 %v901, %v902
        %v904 = vrot.slane %v903, 1
        %v905 = vadd.f32 %v903, %v904
        %v906 = vmul.f32 %v887, %v887
        %v907 = vmul.f32 %v888, %v888
        %v908 = vadd.f32 %v906, %v907
        %v909 = vrot.slane %v908, 4
        %v910 = vadd.f32 %v908, %v909
        %v911 = vrot.slane %v910, 2
        %v912 = vadd.f32 %v910, %v911
        %v913 = vrot.slane %v912, 1
        %v914 = vadd.f32 %v912, %v913
        // Predicated region
        $region69: #{tpu_custom_call.1} parent=51 // pred_check
          %p915 = pneg %p508
        $region70: #{tpu_custom_call.1} parent=51 // pred_check_branch
          %917 = sbr.rel (%p915) target = $region72
        $region71: #{tpu_custom_call.1} parent=51 // pred_region
          %918 = vst [vmem:[%s472] sm:$0x1] %v905
          %919 = vst [vmem:[%s478] sm:$0x1] %v914
        $region72: #{tpu_custom_call.1} parent=51 // pred_fallthru
          _
        %p920 = scmp.gt.s32.totalorder %s39, 0
        // Predicated region
        $region73: #{tpu_custom_call.1} parent=51 // pred_check
          %p921 = pneg %p920
        $region74: #{tpu_custom_call.1} parent=51 // pred_check_branch
          %923 = sbr.rel (%p921) target = $region76
        $region75: #{tpu_custom_call.1} parent=51 // pred_region
          %v924 = vld [vmem:[%s472] sm:$0x1]
          %v925 = vadd.f32 %v924, %v905
          %926 = vst [vmem:[%s472] sm:$0x1] %v925
          %v927 = vld [vmem:[%s478] sm:$0x1]
          %v928 = vadd.f32 %v927, %v914
          %929 = vst [vmem:[%s478] sm:$0x1] %v928
        $region76: #{tpu_custom_call.1} parent=51 // pred_fallthru
          _
        %v930 = vld [vmem:[#allocation2 + $0x11] sm:$0x7f]
        %931 = vst [vmem:[#allocation2 + $0x1] sm:$0x7f] %v930
        %s932 = sand.u32 %s246, 1
        %s933 = scalar_lea.sflag [#allocation5], %s932
        %s934 = sand.u32 %s246, 1
        %s935 = smul.addr %s934, 8
        %s936 = scalar_lea.vmem [#allocation9], %s935
        %s937 = sand.u32 %s34, 1
        %s938 = scalar_lea.sflag [#allocation11], %s937
        %s939 = sand.u32 %s272, 1
        %s940 = scalar_lea.vmem [#allocation10], %s939
        %s941 = sand.u32 %s34, 1
        %s942 = scalar_lea.sflag [#allocation11], %s941
        %s943 = sand.u32 %s298, 1
        %s944 = scalar_lea.vmem [#allocation12], %s943
        // Predicated region
        $region77: #{tpu_custom_call.1} parent=51 // pred_check
          %p945 = pneg %p256
        $region78: #{tpu_custom_call.1} parent=51 // pred_check_branch
          %947 = sbr.rel (%p945) target = $region80
        $region79: #{tpu_custom_call.1} parent=51 // pred_region
          %s948 = smul.u32 2, %s39
          %s950 = ssub.s32 128, 128
          %951 = vsyncadd %s933, %s950
          %s952 = smul.addr %s38, 4
          %s953 = sadd.s32 %s948, %s952
          %s954 = smul.addr %s953, 64
          %s955 = scalar_lea.hbm %s8, %s954
          %s956 = sshll.u32 %s936, 4
          %s957 = int_to_ptr.vmem [resolvable:$true] %s956
          %962 = dma.vmem_to_hbm [thread:$0]  %s957, 128, %s955, %s933, 64, 64, 4
        $region80: #{tpu_custom_call.1} parent=51 // pred_fallthru
          _
        // Predicated region
        $region81: #{tpu_custom_call.1} parent=51 // pred_check
          %p963 = pneg %p282
        $region82: #{tpu_custom_call.1} parent=51 // pred_check_branch
          %965 = sbr.rel (%p963) target = $region84
        $region83: #{tpu_custom_call.1} parent=51 // pred_region
          %s967 = ssub.s32 16, 16
          %968 = vsyncadd %s938, %s967
          %s969 = smul.addr %s38, 16
          %s970 = scalar_lea.hbm %s9, %s969
          %s972 = sshll.u32 %s940, 4
          %s973 = int_to_ptr.vmem [resolvable:$true] %s972
          %975 = dma.vmem_to_hbm [thread:$0]  %s973, 16, %s970, %s938
        $region84: #{tpu_custom_call.1} parent=51 // pred_fallthru
          _
        // Predicated region
        $region85: #{tpu_custom_call.1} parent=51 // pred_check
          %p976 = pneg %p308
        $region86: #{tpu_custom_call.1} parent=51 // pred_check_branch
          %978 = sbr.rel (%p976) target = $region88
        $region87: #{tpu_custom_call.1} parent=51 // pred_region
          %s980 = ssub.s32 16, 16
          %981 = vsyncadd %s942, %s980
          %s982 = smul.addr %s38, 16
          %s983 = scalar_lea.hbm %s10, %s982
          %s985 = sshll.u32 %s944, 4
          %s986 = int_to_ptr.vmem [resolvable:$true] %s985
          %988 = dma.vmem_to_hbm [thread:$0]  %s986, 16, %s983, %s942
        $region88: #{tpu_custom_call.1} parent=51 // pred_fallthru
          _
      $region52: #{tpu_custom_call.1} parent=5 // pred_fallthru
        _
      %p989 = scmp.le.s32.totalorder 2, %s29
      // Predicated region
      $region89: #{tpu_custom_call.1} parent=5 // pred_check
        %p990 = pneg %p989
      $region90: #{tpu_custom_call.1} parent=5 // pred_check_branch
        %992 = sbr.rel (%p990) target = $region92
      $region91: #{tpu_custom_call.1} parent=5 // pred_region
        %s993 = ssub.s32 %s29, 2
        // Predicated region
        $region93: #{tpu_custom_call.1} parent=91 // pred_check
          %p994 = pneg %p262
        $region94: #{tpu_custom_call.1} parent=91 // pred_check_branch
          %996 = sbr.rel (%p994) target = $region96
        $region95: #{tpu_custom_call.1} parent=91 // pred_region
          %s997 = sand.u32 %s247, 1
          %s998 = scalar_lea.sflag [#allocation5], %s997
          %s999 = sand.u32 %s247, 1
          %s1000 = smul.addr %s999, 8
          %s1001 = scalar_lea.vmem [#allocation9], %s1000
          %1002 = dma.done %s998, 128
        $region96: #{tpu_custom_call.1} parent=91 // pred_fallthru
          _
        // Predicated region
        $region97: #{tpu_custom_call.1} parent=91 // pred_check
          %p1003 = pneg %p288
        $region98: #{tpu_custom_call.1} parent=91 // pred_check_branch
          %1005 = sbr.rel (%p1003) target = $region100
        $region99: #{tpu_custom_call.1} parent=91 // pred_region
          %s1006 = sand.u32 %s35, 1
          %s1007 = scalar_lea.sflag [#allocation11], %s1006
          %s1008 = sand.u32 %s273, 1
          %s1009 = scalar_lea.vmem [#allocation10], %s1008
          %1010 = dma.done %s1007, 16
        $region100: #{tpu_custom_call.1} parent=91 // pred_fallthru
          _
        // Predicated region
        $region101: #{tpu_custom_call.1} parent=91 // pred_check
          %p1011 = pneg %p314
        $region102: #{tpu_custom_call.1} parent=91 // pred_check_branch
          %1013 = sbr.rel (%p1011) target = $region104
        $region103: #{tpu_custom_call.1} parent=91 // pred_region
          %s1014 = sand.u32 %s35, 1
          %s1015 = scalar_lea.sflag [#allocation11], %s1014
          %s1016 = sand.u32 %s299, 1
          %s1017 = scalar_lea.vmem [#allocation12], %s1016
          %1018 = dma.done %s1015, 16
        $region104: #{tpu_custom_call.1} parent=91 // pred_fallthru
          _
      $region92: #{tpu_custom_call.1} parent=5 // pred_fallthru
        _
    $region6: #{tpu_custom_call.1} parent=1 // loop_footer
      %s33 = sadd.s32 1, %s29
    $region7: #{tpu_custom_call.1} parent=1 // loop_footer_branch
      %28 = sbr.rel target = $region3
    $region8: #{tpu_custom_call.1} parent=1 // loop_exit
      _
    %1019 = vsyncpa [#allocation4], 1
    %s1020 = scalar_lea.sflag [#allocation4], 1
    %1021 = vsyncpa %s1020, 1
    %1022 = vsyncpa [#allocation7], 1
    %s1023 = scalar_lea.sflag [#allocation7], 1
    %1024 = vsyncpa %s1023, 1
    %1025 = vsyncpa [#allocation5], 1
    %s1026 = scalar_lea.sflag [#allocation5], 1
    %1027 = vsyncpa %s1026, 1
    %1028 = vsyncpa [#allocation11], 1
    %s1029 = scalar_lea.sflag [#allocation11], 1
    %1030 = vsyncpa %s1029, 1

</llo_original>
